<compile_context>
chip_gen: v6e
topology: v6e:2x2x1
jax: 0.10.0
libtpu: 0.0.40
codegen_flags: <defaults>
</compile_context>

<pallas_src>
import jax
import jax.numpy as jnp
from jax import lax
from jax.experimental import pallas as pl
from jax.experimental.pallas import tpu as pltpu


def _round_up(x, m):
    return (x + m - 1) // m * m


# ----------------------------- Pallas kernel --------------------------------

def _rvq_fused_kernel(x_ref, w_in_all_ref, b_fold_ref, ct_ref, cbn_ref, cb_t_ref,
                      w_out_all_ref, b_out_sum_ref,
                      q_ref, codes_ref, z_ref):
    """Fused residual VQ over all codebooks for one (1, H, tt) time tile.

    Column-major (channels x time) throughout: time is the lane axis.

    x_ref        : (1, H, tt)       bf16 input tile (PyTorch NCL layout)
    w_in_all_ref : (nq*D, H)        bf16, stacked in_proj weights
    b_fold_ref   : (nq, D, 1)       f32,  b_in_j - sum_{k<j} W_in_j @ b_out_k
    ct_ref       : (nq, D, nq*D)    bf16, C[j, :, k*D:(k+1)*D] = W_in_j @ W_out_k (k<j)
    cbn_ref      : (nq, N, D)       bf16, L2-normalized codebooks
    cb_t_ref     : (nq, D, N)       bf16, raw codebooks, transposed (for lookup)
    w_out_all_ref: (H, nq*D)        bf16, stacked out_proj weights
    b_out_sum_ref: (H, 1)           f32,  sum_k b_out_k
    q_ref        : (1, H, tt)       f32,  sum_k out_proj_k(q_k)
    codes_ref    : (1, nq, tt)      int32 codebook indices
    z_ref        : (1, nq*D, tt)    f32,  projected latents (pre-quantization)
    """
    n_q, n_codes, d = cbn_ref.shape
    tt = x_ref.shape[-1]

    x = x_ref[0]                                                  # (H, tt) bf16
    # One wide in_proj matmul for ALL codebooks: A[j*D+e, t] = in_proj_j(x)[e, t]
    a = jnp.dot(w_in_all_ref[...], x, preferred_element_type=jnp.float32)

    # Codebook-entry index iota (hoisted out of the unrolled loop).
    ids = lax.broadcasted_iota(jnp.int32, (n_codes, tt), 0)

    q_list, z_list, idx_list = [], [], []
    for j in range(n_q):                                          # static unroll
        # z_j = W_in_j @ residual_j + b_in_j, expressed through A and the
        # precomputed D x D cross matrices (residual never materialized).
        z = a[j * d:(j + 1) * d, :] + b_fold_ref[j]               # (D, tt) f32
        if j > 0:
            q_prefix = jnp.concatenate(q_list, axis=0)            # (j*D, tt) bf16
            ct_j = ct_ref[j][:, :j * d]                           # (D, j*D) bf16
            z = z - jnp.dot(ct_j, q_prefix, preferred_element_type=jnp.float32)
        z_list.append(z)

        # Cosine-similarity argmax. The z row-normalization (positive per-row
        # scale) and the +||cbn||^2 term (==1, codebook pre-normalized) do not
        # change the argmax and are omitted.
        cross = jnp.dot(cbn_ref[j], z.astype(jnp.bfloat16),
                        preferred_element_type=jnp.float32)       # (N, tt)
        cmax = jnp.max(cross, axis=0, keepdims=True)              # (1, tt)
        idx = jnp.min(jnp.where(cross == cmax, ids, n_codes),
                      axis=0, keepdims=True).astype(jnp.int32)    # first-max tie-break
        idx_list.append(idx)

        # Codebook lookup via one-hot matmul (gather-free, runs on the MXU).
        onehot = (ids == idx).astype(jnp.bfloat16)                # (N, tt)
        qj = jnp.dot(cb_t_ref[j], onehot,
                     preferred_element_type=jnp.float32)          # (D, tt)
        q_list.append(qj.astype(jnp.bfloat16))

    # Single stacked out_proj for all codebooks + folded bias sum.
    q_all = jnp.concatenate(q_list, axis=0)                       # (nq*D, tt) bf16
    q_ref[0] = jnp.dot(w_out_all_ref[...], q_all,
                       preferred_element_type=jnp.float32) + b_out_sum_ref[...]
    # Lane-dense stores (last dim = tt, multiple of 128), one per output.
    codes_ref[0] = jnp.concatenate(idx_list, axis=0)              # (nq, tt) int32
    z_ref[0] = jnp.concatenate(z_list, axis=0)                    # (nq*D, tt) f32


# ----------------------------- Module wrapper --------------------------------

def init_rvq_params(key, n_codebooks, hidden_size, codebook_dim, codebook_size):
    params = []
    for i in range(n_codebooks):
        k = jax.random.fold_in(key, i)
        k1, k2, k3, k4, k5 = jax.random.split(k, 5)
        params.append(dict(
            w_in=jax.random.normal(k1, (codebook_dim, hidden_size), jnp.float32) * 0.1,
            b_in=jax.random.normal(k2, (codebook_dim,), jnp.float32) * 0.1,
            w_out=jax.random.normal(k3, (hidden_size, codebook_dim), jnp.float32) * 0.1,
            b_out=jax.random.normal(k4, (hidden_size,), jnp.float32) * 0.1,
            codebook=jax.random.normal(k5, (codebook_size, codebook_dim), jnp.float32),
        ))
    return params


def dac_residual_vq_forward(hidden_state, params, n_quantizers=None, block_cols=512):
    """Eval-mode forward of DacResidualVectorQuantize.

    hidden_state: (B, hidden_size, T)  (PyTorch NCL convention)
    Returns (quantized_representation (B,H,T), audio_codes (B,nq,T) int32,
             projected_latents (B, nq*D, T), commitment_loss (B,), codebook_loss (B,))
    """
    n_codebooks = len(params)
    n_q = n_codebooks if n_quantizers is None else min(int(n_quantizers), n_codebooks)

    B, H, T = hidden_state.shape
    N, D = params[0]["codebook"].shape
    ND = n_q * D

    # Stack per-codebook params (eval mode only uses the first n_q quantizers).
    w_in = jnp.stack([params[i]["w_in"] for i in range(n_q)]).astype(jnp.float32)    # (nq,D,H)
    b_in = jnp.stack([params[i]["b_in"] for i in range(n_q)]).astype(jnp.float32)    # (nq,D)
    w_out = jnp.stack([params[i]["w_out"] for i in range(n_q)]).astype(jnp.float32)  # (nq,H,D)
    b_out = jnp.stack([params[i]["b_out"] for i in range(n_q)]).astype(jnp.float32)  # (nq,H)
    cb = jnp.stack([params[i]["codebook"] for i in range(n_q)]).astype(jnp.float32)  # (nq,N,D)

    # --- Restructured projections: wide stacked matmuls + D x D cross terms ---
    w_in_all = w_in.reshape(ND, H)                                       # (nq*D, H)
    w_out_all = jnp.transpose(w_out, (1, 0, 2)).reshape(H, ND)           # (H, nq*D)
    b_out_prefix = jnp.cumsum(b_out, axis=0) - b_out                     # sum_{k<j} b_out_k
    b_fold = (b_in - jnp.einsum("jdh,jh->jd", w_in, b_out_prefix))[:, :, None]   # (nq,D,1)
    ct_full = jnp.einsum("jdh,khe->jkde", w_in, w_out)                   # C[j,k]=W_in_j@W_out_k
    mask = (jnp.arange(n_q)[:, None] > jnp.arange(n_q)[None, :]).astype(ct_full.dtype)
    ct = jnp.transpose(ct_full * mask[:, :, None, None], (0, 2, 1, 3)).reshape(n_q, D, ND)
    b_out_sum = jnp.sum(b_out, axis=0)[:, None]                          # (H, 1)

    # Pre-normalized codebook (cosine argmax) and raw transposed codebook (lookup).
    cbn = cb / jnp.maximum(jnp.sqrt(jnp.sum(cb * cb, axis=2, keepdims=True)), 1e-12)
    cb_t = jnp.transpose(cb, (0, 2, 1))                                  # (nq, D, N)

    # bf16 MXU operands (f32 accumulation kept via preferred_element_type).
    w_in_all = w_in_all.astype(jnp.bfloat16)
    w_out_all = w_out_all.astype(jnp.bfloat16)
    ct = ct.astype(jnp.bfloat16)
    cbn_bf = cbn.astype(jnp.bfloat16)
    cb_t_bf = cb_t.astype(jnp.bfloat16)

    # --- Time tiling: lane axis = time, tiles are multiples of 128 ---
    t_pad = _round_up(T, 128)
    tt = min(_round_up(block_cols, 128), t_pad)
    t_pad = _round_up(t_pad, tt)
    num_t = t_pad // tt

    x = hidden_state.astype(jnp.bfloat16)
    if t_pad != T:
        x = jnp.pad(x, ((0, 0), (0, 0), (0, t_pad - T)))

    # Generation-aware VMEM clamp (v7x has 64 MiB per TensorCore).
    try:
        cap = int(getattr(pltpu.get_tpu_info(), "vmem_capacity_bytes", 64 * 1024 * 1024))
    except Exception:
        cap = 64 * 1024 * 1024
    resident = 2 * (w_in_all.size + w_out_all.size + ct.size + cbn_bf.size + cb_t_bf.size) \
               + 4 * (b_fold.size + b_out_sum.size)
    per_tile = (2 * H * tt * 2 + 2 * H * tt * 4              # x (bf16) + q (f32), double-buffered
                + 2 * n_q * tt * 4 + 2 * ND * tt * 4          # codes + latents, double-buffered
                + ND * tt * 4                                 # wide in_proj result A
                + 2 * N * tt * (4 + 2)                        # cross + one-hot (+slack)
                + 4 * ND * tt * 4)                            # q_all / z concat temporaries
    est = 2 * resident + per_tile
    vmem_limit = int(min(max(2 * est, 32 * 1024 * 1024), int(cap * 0.6)))

    grid_spec = pltpu.PrefetchScalarGridSpec(
        num_scalar_prefetch=0,
        grid=(B, num_t),
        in_specs=[
            pl.BlockSpec((1, H, tt), lambda b, i: (b, 0, i)),        # x (NCL, tiled over T)
            pl.BlockSpec((ND, H), lambda b, i: (0, 0)),              # w_in_all   (resident)
            pl.BlockSpec((n_q, D, 1), lambda b, i: (0, 0, 0)),       # b_fold     (resident)
            pl.BlockSpec((n_q, D, ND), lambda b, i: (0, 0, 0)),      # ct         (resident)
            pl.BlockSpec((n_q, N, D), lambda b, i: (0, 0, 0)),       # cbn        (resident)
            pl.BlockSpec((n_q, D, N), lambda b, i: (0, 0, 0)),       # cb_t       (resident)
            pl.BlockSpec((H, ND), lambda b, i: (0, 0)),              # w_out_all  (resident)
            pl.BlockSpec((H, 1), lambda b, i: (0, 0)),               # b_out_sum  (resident)
        ],
        out_specs=(
            pl.BlockSpec((1, H, tt), lambda b, i: (b, 0, i)),        # quantized sum (NCL)
            pl.BlockSpec((1, n_q, tt), lambda b, i: (b, 0, i)),      # codes (NCL)
            pl.BlockSpec((1, ND, tt), lambda b, i: (b, 0, i)),       # projected latents (NCL)
        ),
    )

    q_out, codes_out, z_out = pl.pallas_call(
        _rvq_fused_kernel,
        out_shape=(
            jax.ShapeDtypeStruct((B, H, t_pad), jnp.float32),
            jax.ShapeDtypeStruct((B, n_q, t_pad), jnp.int32),
            jax.ShapeDtypeStruct((B, ND, t_pad), jnp.float32),
        ),
        grid_spec=grid_spec,
        compiler_params=pltpu.CompilerParams(
            dimension_semantics=("parallel", "parallel"),
            vmem_limit_bytes=vmem_limit,
        ),
    )(x, w_in_all, b_fold, ct, cbn_bf, cb_t_bf, w_out_all, b_out_sum)

    # Outputs are already in the final PyTorch layouts; just strip time padding.
    quantized_representation = q_out[:, :, :T]
    audio_codes = codes_out[:, :, :T]
    projected_latents = z_out[:, :, :T]

    # Losses recomputed from kernel outputs (same z / codes, tiny gather work);
    # keeps both grid axes "parallel"-safe (no cross-tile accumulator race).
    z_resh = projected_latents.reshape(B, n_q, D, T)
    q_vecs = cb[jnp.arange(n_q)[None, :, None], audio_codes]             # (B, nq, T, D)
    q_vecs = jnp.transpose(q_vecs, (0, 1, 3, 2))                         # (B, nq, D, T)
    mse_per_cb = jnp.mean((z_resh - q_vecs) ** 2, axis=(0, 2, 3))        # (nq,)
    total = jnp.sum(mse_per_cb)
    # Eval-mode mask (i < n_quantizers) is all-True for the processed codebooks.
    commitment_loss = jnp.broadcast_to(total, (B,)).astype(jnp.float32)
    codebook_loss = commitment_loss
    # TODO(synk): training-mode quantizer_dropout (random per-sample n_quantizers,
    # per-sample loss masking) is not implemented; this is the eval-mode forward.
    return (quantized_representation, audio_codes, projected_latents,
            commitment_loss, codebook_loss)


# ----------------------------- Pure-JAX reference ----------------------------

def _reference_forward(hidden_state, params, n_quantizers=None, forced_codes=None):
    n_codebooks = len(params)
    n_q = n_codebooks if n_quantizers is None else min(int(n_quantizers), n_codebooks)
    B, H, T = hidden_state.shape
    hp = lax.Precision.HIGHEST
    residual = hidden_state.astype(jnp.float32)
    quantized_total = jnp.zeros_like(residual)
    loss = jnp.zeros((B,), jnp.float32)
    codes, lats = [], []
    for i in range(n_q):
        p = params[i]
        z = jnp.einsum("bht,dh->bdt", residual, p["w_in"], precision=hp) \
            + p["b_in"][None, :, None]
        enc = jnp.transpose(z, (0, 2, 1)).reshape(B * T, -1)
        zn = enc / jnp.maximum(jnp.linalg.norm(enc, axis=1, keepdims=True), 1e-12)
        cb = p["codebook"]
        cbn = cb / jnp.maximum(jnp.linalg.norm(cb, axis=1, keepdims=True), 1e-12)
        dist = -(jnp.sum(zn ** 2, 1, keepdims=True)
                 - 2 * jnp.einsum("nd,kd->nk", zn, cbn, precision=hp)) \
               + jnp.sum(cbn ** 2, 1)[None, :]
        idx = jnp.argmax(dist, axis=1)
        if forced_codes is not None:
            idx = forced_codes[:, i, :].reshape(B * T)
        q = cb[idx].reshape(B, T, -1).transpose(0, 2, 1)
        mse = jnp.mean((z - q) ** 2)
        out = jnp.einsum("bdt,hd->bht", q, p["w_out"], precision=hp) \
            + p["b_out"][None, :, None]
        quantized_total = quantized_total + out
        residual = residual - out
        loss = loss + mse
        codes.append(idx.reshape(B, T))
        lats.append(z)
    return (quantized_total, jnp.stack(codes, 1), jnp.concatenate(lats, 1), loss, loss)


# ----------------------------------- main ------------------------------------

if __name__ == "__main__":
    # Small DacConfig-like setup (exercises multi-tile grid + time padding).
    n_codebooks = 3
    hidden_size = 32
    codebook_dim = 8
    codebook_size = 128
    B, T = 2, 320          # T pads 320 -> 384; tt=128 -> grid (2, 3) = 6 steps

    key = jax.random.PRNGKey(0)
    k_params, k_x = jax.random.split(key)
    params = init_rvq_params(k_params, n_codebooks, hidden_size, codebook_dim, codebook_size)
    hidden_state = jax.random.normal(k_x, (B, hidden_size, T), jnp.float32)

    outs = dac_residual_vq_forward(hidden_state, params, block_cols=128)
    outs = jax.block_until_ready(outs)
    q_rep, audio_codes, proj_lat, commit_loss, cb_loss = outs

    assert q_rep.shape == (B, hidden_size, T)
    assert audio_codes.shape == (B, n_codebooks, T)
    assert proj_lat.shape == (B, n_codebooks * codebook_dim, T)
    assert commit_loss.shape == (B,) and cb_loss.shape == (B,)

    # 1) Code selection vs. the free-running f32 reference. bf16 MXU operands
    #    can flip rare near-tie argmaxes; a flip in codebook 0 cascades to later
    #    codebooks through the residual, so codebook 0 is checked tightly and
    #    the full tensor loosely (a real argmax bug would give ~1/128 match).
    ref = _reference_forward(hidden_state, params)
    cb0_match = float(jnp.mean((audio_codes[:, 0, :] == ref[1][:, 0, :]).astype(jnp.float32)))
    all_match = float(jnp.mean((audio_codes == ref[1]).astype(jnp.float32)))
    assert cb0_match > 0.95, f"codebook-0 code match rate too low: {cb0_match}"
    assert all_match > 0.90, f"overall code match rate too low: {all_match}"

    # 2) Value check with the kernel's own code choices forced into the f32
    #    reference, so a rare near-tie flip cannot cascade into value errors.
    ref_f = _reference_forward(hidden_state, params, forced_codes=audio_codes)
    assert jnp.allclose(q_rep, ref_f[0], atol=2e-2, rtol=2e-2)
    assert jnp.allclose(proj_lat, ref_f[2], atol=2e-2, rtol=2e-2)
    assert jnp.allclose(commit_loss, ref_f[3], atol=5e-2, rtol=5e-2)
    assert jnp.allclose(cb_loss, ref_f[4], atol=5e-2, rtol=5e-2)

    print("KERNEL_OK")
</pallas_src>

<mosaic_0001>
module attributes {stable_mosaic.version = 11 : i64} {
  func.func @_rvq_fused_kernel(%arg0: i32, %arg1: i32, %arg2: memref<1x32x128xbf16, #tpu.memory_space<vmem>>, %arg3: memref<24x32xbf16, #tpu.memory_space<vmem>>, %arg4: memref<3x8x1xf32, #tpu.memory_space<vmem>>, %arg5: memref<3x8x24xbf16, #tpu.memory_space<vmem>>, %arg6: memref<3x128x8xbf16, #tpu.memory_space<vmem>>, %arg7: memref<3x8x128xbf16, #tpu.memory_space<vmem>>, %arg8: memref<32x24xbf16, #tpu.memory_space<vmem>>, %arg9: memref<32x1xf32, #tpu.memory_space<vmem>>, %arg10: memref<1x32x128xf32, #tpu.memory_space<vmem>>, %arg11: memref<1x3x128xi32, #tpu.memory_space<vmem>>, %arg12: memref<1x24x128xf32, #tpu.memory_space<vmem>>) attributes {dimension_semantics = [#tpu.dimension_semantics<parallel>, #tpu.dimension_semantics<parallel>], iteration_bounds = array<i64: 2, 3>, scalar_prefetch = 0 : i64, scratch_operands = 0 : i64, tpu.core_type = #tpu.core_type<tc>, window_params = [{transform_indices = @transform_0, window_bounds = array<i64: 1, 32, 128>}, {pipeline_mode = #tpu.pipeline_mode<synchronous>, transform_indices = @transform_1, window_bounds = array<i64: 24, 32>}, {pipeline_mode = #tpu.pipeline_mode<synchronous>, transform_indices = @transform_2, window_bounds = array<i64: 3, 8, 1>}, {pipeline_mode = #tpu.pipeline_mode<synchronous>, transform_indices = @transform_3, window_bounds = array<i64: 3, 8, 24>}, {pipeline_mode = #tpu.pipeline_mode<synchronous>, transform_indices = @transform_4, window_bounds = array<i64: 3, 128, 8>}, {pipeline_mode = #tpu.pipeline_mode<synchronous>, transform_indices = @transform_5, window_bounds = array<i64: 3, 8, 128>}, {pipeline_mode = #tpu.pipeline_mode<synchronous>, transform_indices = @transform_6, window_bounds = array<i64: 32, 24>}, {pipeline_mode = #tpu.pipeline_mode<synchronous>, transform_indices = @transform_7, window_bounds = array<i64: 32, 1>}, {transform_indices = @transform_8, window_bounds = array<i64: 1, 32, 128>}, {transform_indices = @transform_9, window_bounds = array<i64: 1, 3, 128>}, {transform_indices = @transform_10, window_bounds = array<i64: 1, 24, 128>}]} {
    %c0 = arith.constant 0 : index
    %c0_0 = arith.constant 0 : index
    %c0_1 = arith.constant 0 : index
    %0 = vector.load %arg2[%c0, %c0_0, %c0_1] : memref<1x32x128xbf16, #tpu.memory_space<vmem>>, vector<1x32x128xbf16>
    %1 = vector.shape_cast %0 : vector<1x32x128xbf16> to vector<32x128xbf16>
    %c0_2 = arith.constant 0 : index
    %c0_3 = arith.constant 0 : index
    %2 = vector.load %arg3[%c0_2, %c0_3] : memref<24x32xbf16, #tpu.memory_space<vmem>>, vector<24x32xbf16>
    %cst = arith.constant dense<0.000000e+00> : vector<24x128xf32>
    %3 = tpu.matmul %2, %1, %cst {dimension_numbers = #tpu.dot_dimension_numbers<[1], [0], [0], [1], [0, 0, 1, 1], [], []>} : vector<24x32xbf16>, vector<32x128xbf16>, vector<24x128xf32> -> vector<24x128xf32>
    %4 = tpu.iota {dimensions = array<i32: 0>} : vector<128x128xi32>
    %5 = vector.extract_strided_slice %3 {offsets = [0, 0], sizes = [8, 128], strides = [1, 1]} : vector<24x128xf32> to vector<8x128xf32>
    %c0_4 = arith.constant 0 : index
    %c0_5 = arith.constant 0 : index
    %c0_6 = arith.constant 0 : index
    %6 = vector.load %arg4[%c0_4, %c0_5, %c0_6] : memref<3x8x1xf32, #tpu.memory_space<vmem>>, vector<1x8x1xf32>
    %7 = vector.shape_cast %6 : vector<1x8x1xf32> to vector<8x1xf32>
    %8 = vector.broadcast %7 : vector<8x1xf32> to vector<8x128xf32>
    %9 = arith.addf %5, %8 : vector<8x128xf32>
    %c0_7 = arith.constant 0 : index
    %c0_8 = arith.constant 0 : index
    %c0_9 = arith.constant 0 : index
    %10 = vector.load %arg6[%c0_7, %c0_8, %c0_9] : memref<3x128x8xbf16, #tpu.memory_space<vmem>>, vector<1x128x8xbf16>
    %11 = vector.shape_cast %10 : vector<1x128x8xbf16> to vector<128x8xbf16>
    %12 = arith.truncf %9 : vector<8x128xf32> to vector<8x128xbf16>
    %cst_10 = arith.constant dense<0.000000e+00> : vector<128x128xf32>
    %13 = tpu.matmul %11, %12, %cst_10 {dimension_numbers = #tpu.dot_dimension_numbers<[1], [0], [0], [1], [0, 0, 1, 1], [], []>} : vector<128x8xbf16>, vector<8x128xbf16>, vector<128x128xf32> -> vector<128x128xf32>
    %cst_11 = arith.constant dense<0xFF800000> : vector<128xf32>
    %14 = vector.multi_reduction <maximumf>, %13, %cst_11 [0] : vector<128x128xf32> to vector<128xf32>
    %15 = vector.shape_cast %14 : vector<128xf32> to vector<1x128xf32>
    %16 = vector.broadcast %15 : vector<1x128xf32> to vector<128x128xf32>
    %17 = arith.cmpf oeq, %13, %16 : vector<128x128xf32>
    %c128_i32 = arith.constant 128 : i32
    %18 = vector.broadcast %c128_i32 : i32 to vector<128x128xi32>
    %19 = arith.select %17, %4, %18 : vector<128x128xi1>, vector<128x128xi32>
    %cst_12 = arith.constant dense<2147483647> : vector<128xi32>
    %20 = vector.multi_reduction <minsi>, %19, %cst_12 [0] : vector<128x128xi32> to vector<128xi32>
    %21 = vector.shape_cast %20 : vector<128xi32> to vector<1x128xi32>
    %22 = vector.broadcast %21 : vector<1x128xi32> to vector<128x128xi32>
    %23 = arith.cmpi eq, %4, %22 : vector<128x128xi32>
    %24 = arith.extui %23 : vector<128x128xi1> to vector<128x128xi32>
    %25 = arith.sitofp %24 : vector<128x128xi32> to vector<128x128xf32>
    %26 = arith.truncf %25 : vector<128x128xf32> to vector<128x128xbf16>
    %c0_13 = arith.constant 0 : index
    %c0_14 = arith.constant 0 : index
    %c0_15 = arith.constant 0 : index
    %27 = vector.load %arg7[%c0_13, %c0_14, %c0_15] : memref<3x8x128xbf16, #tpu.memory_space<vmem>>, vector<1x8x128xbf16>
    %28 = vector.shape_cast %27 : vector<1x8x128xbf16> to vector<8x128xbf16>
    %cst_16 = arith.constant dense<0.000000e+00> : vector<8x128xf32>
    %29 = tpu.matmul %28, %26, %cst_16 {dimension_numbers = #tpu.dot_dimension_numbers<[1], [0], [0], [1], [0, 0, 1, 1], [], []>} : vector<8x128xbf16>, vector<128x128xbf16>, vector<8x128xf32> -> vector<8x128xf32>
    %30 = arith.truncf %29 : vector<8x128xf32> to vector<8x128xbf16>
    %31 = vector.extract_strided_slice %3 {offsets = [8, 0], sizes = [8, 128], strides = [1, 1]} : vector<24x128xf32> to vector<8x128xf32>
    %c1 = arith.constant 1 : index
    %c0_17 = arith.constant 0 : index
    %c0_18 = arith.constant 0 : index
    %32 = vector.load %arg4[%c1, %c0_17, %c0_18] : memref<3x8x1xf32, #tpu.memory_space<vmem>>, vector<1x8x1xf32>
    %33 = vector.shape_cast %32 : vector<1x8x1xf32> to vector<8x1xf32>
    %34 = vector.broadcast %33 : vector<8x1xf32> to vector<8x128xf32>
    %35 = arith.addf %31, %34 : vector<8x128xf32>
    %c1_19 = arith.constant 1 : index
    %c0_20 = arith.constant 0 : index
    %c0_21 = arith.constant 0 : index
    %36 = vector.load %arg5[%c1_19, %c0_20, %c0_21] : memref<3x8x24xbf16, #tpu.memory_space<vmem>>, vector<1x8x24xbf16>
    %37 = vector.shape_cast %36 : vector<1x8x24xbf16> to vector<8x24xbf16>
    %38 = vector.extract_strided_slice %37 {offsets = [0, 0], sizes = [8, 8], strides = [1, 1]} : vector<8x24xbf16> to vector<8x8xbf16>
    %cst_22 = arith.constant dense<0.000000e+00> : vector<8x128xf32>
    %39 = tpu.matmul %38, %30, %cst_22 {dimension_numbers = #tpu.dot_dimension_numbers<[1], [0], [0], [1], [0, 0, 1, 1], [], []>} : vector<8x8xbf16>, vector<8x128xbf16>, vector<8x128xf32> -> vector<8x128xf32>
    %40 = arith.subf %35, %39 : vector<8x128xf32>
    %c1_23 = arith.constant 1 : index
    %c0_24 = arith.constant 0 : index
    %c0_25 = arith.constant 0 : index
    %41 = vector.load %arg6[%c1_23, %c0_24, %c0_25] : memref<3x128x8xbf16, #tpu.memory_space<vmem>>, vector<1x128x8xbf16>
    %42 = vector.shape_cast %41 : vector<1x128x8xbf16> to vector<128x8xbf16>
    %43 = arith.truncf %40 : vector<8x128xf32> to vector<8x128xbf16>
    %cst_26 = arith.constant dense<0.000000e+00> : vector<128x128xf32>
    %44 = tpu.matmul %42, %43, %cst_26 {dimension_numbers = #tpu.dot_dimension_numbers<[1], [0], [0], [1], [0, 0, 1, 1], [], []>} : vector<128x8xbf16>, vector<8x128xbf16>, vector<128x128xf32> -> vector<128x128xf32>
    %cst_27 = arith.constant dense<0xFF800000> : vector<128xf32>
    %45 = vector.multi_reduction <maximumf>, %44, %cst_27 [0] : vector<128x128xf32> to vector<128xf32>
    %46 = vector.shape_cast %45 : vector<128xf32> to vector<1x128xf32>
    %47 = vector.broadcast %46 : vector<1x128xf32> to vector<128x128xf32>
    %48 = arith.cmpf oeq, %44, %47 : vector<128x128xf32>
    %c128_i32_28 = arith.constant 128 : i32
    %49 = vector.broadcast %c128_i32_28 : i32 to vector<128x128xi32>
    %50 = arith.select %48, %4, %49 : vector<128x128xi1>, vector<128x128xi32>
    %cst_29 = arith.constant dense<2147483647> : vector<128xi32>
    %51 = vector.multi_reduction <minsi>, %50, %cst_29 [0] : vector<128x128xi32> to vector<128xi32>
    %52 = vector.shape_cast %51 : vector<128xi32> to vector<1x128xi32>
    %53 = vector.broadcast %52 : vector<1x128xi32> to vector<128x128xi32>
    %54 = arith.cmpi eq, %4, %53 : vector<128x128xi32>
    %55 = arith.extui %54 : vector<128x128xi1> to vector<128x128xi32>
    %56 = arith.sitofp %55 : vector<128x128xi32> to vector<128x128xf32>
    %57 = arith.truncf %56 : vector<128x128xf32> to vector<128x128xbf16>
    %c1_30 = arith.constant 1 : index
    %c0_31 = arith.constant 0 : index
    %c0_32 = arith.constant 0 : index
    %58 = vector.load %arg7[%c1_30, %c0_31, %c0_32] : memref<3x8x128xbf16, #tpu.memory_space<vmem>>, vector<1x8x128xbf16>
    %59 = vector.shape_cast %58 : vector<1x8x128xbf16> to vector<8x128xbf16>
    %cst_33 = arith.constant dense<0.000000e+00> : vector<8x128xf32>
    %60 = tpu.matmul %59, %57, %cst_33 {dimension_numbers = #tpu.dot_dimension_numbers<[1], [0], [0], [1], [0, 0, 1, 1], [], []>} : vector<8x128xbf16>, vector<128x128xbf16>, vector<8x128xf32> -> vector<8x128xf32>
    %61 = arith.truncf %60 : vector<8x128xf32> to vector<8x128xbf16>
    %62 = vector.extract_strided_slice %3 {offsets = [16, 0], sizes = [8, 128], strides = [1, 1]} : vector<24x128xf32> to vector<8x128xf32>
    %c2 = arith.constant 2 : index
    %c0_34 = arith.constant 0 : index
    %c0_35 = arith.constant 0 : index
    %63 = vector.load %arg4[%c2, %c0_34, %c0_35] : memref<3x8x1xf32, #tpu.memory_space<vmem>>, vector<1x8x1xf32>
    %64 = vector.shape_cast %63 : vector<1x8x1xf32> to vector<8x1xf32>
    %65 = vector.broadcast %64 : vector<8x1xf32> to vector<8x128xf32>
    %66 = arith.addf %62, %65 : vector<8x128xf32>
    %67 = tpu.concatenate %30, %61 in 0 : vector<8x128xbf16>, vector<8x128xbf16> -> vector<16x128xbf16>
    %c2_36 = arith.constant 2 : index
    %c0_37 = arith.constant 0 : index
    %c0_38 = arith.constant 0 : index
    %68 = vector.load %arg5[%c2_36, %c0_37, %c0_38] : memref<3x8x24xbf16, #tpu.memory_space<vmem>>, vector<1x8x24xbf16>
    %69 = vector.shape_cast %68 : vector<1x8x24xbf16> to vector<8x24xbf16>
    %70 = vector.extract_strided_slice %69 {offsets = [0, 0], sizes = [8, 16], strides = [1, 1]} : vector<8x24xbf16> to vector<8x16xbf16>
    %cst_39 = arith.constant dense<0.000000e+00> : vector<8x128xf32>
    %71 = tpu.matmul %70, %67, %cst_39 {dimension_numbers = #tpu.dot_dimension_numbers<[1], [0], [0], [1], [0, 0, 1, 1], [], []>} : vector<8x16xbf16>, vector<16x128xbf16>, vector<8x128xf32> -> vector<8x128xf32>
    %72 = arith.subf %66, %71 : vector<8x128xf32>
    %c2_40 = arith.constant 2 : index
    %c0_41 = arith.constant 0 : index
    %c0_42 = arith.constant 0 : index
    %73 = vector.load %arg6[%c2_40, %c0_41, %c0_42] : memref<3x128x8xbf16, #tpu.memory_space<vmem>>, vector<1x128x8xbf16>
    %74 = vector.shape_cast %73 : vector<1x128x8xbf16> to vector<128x8xbf16>
    %75 = arith.truncf %72 : vector<8x128xf32> to vector<8x128xbf16>
    %cst_43 = arith.constant dense<0.000000e+00> : vector<128x128xf32>
    %76 = tpu.matmul %74, %75, %cst_43 {dimension_numbers = #tpu.dot_dimension_numbers<[1], [0], [0], [1], [0, 0, 1, 1], [], []>} : vector<128x8xbf16>, vector<8x128xbf16>, vector<128x128xf32> -> vector<128x128xf32>
    %cst_44 = arith.constant dense<0xFF800000> : vector<128xf32>
    %77 = vector.multi_reduction <maximumf>, %76, %cst_44 [0] : vector<128x128xf32> to vector<128xf32>
    %78 = vector.shape_cast %77 : vector<128xf32> to vector<1x128xf32>
    %79 = vector.broadcast %78 : vector<1x128xf32> to vector<128x128xf32>
    %80 = arith.cmpf oeq, %76, %79 : vector<128x128xf32>
    %c128_i32_45 = arith.constant 128 : i32
    %81 = vector.broadcast %c128_i32_45 : i32 to vector<128x128xi32>
    %82 = arith.select %80, %4, %81 : vector<128x128xi1>, vector<128x128xi32>
    %cst_46 = arith.constant dense<2147483647> : vector<128xi32>
    %83 = vector.multi_reduction <minsi>, %82, %cst_46 [0] : vector<128x128xi32> to vector<128xi32>
    %84 = vector.shape_cast %83 : vector<128xi32> to vector<1x128xi32>
    %85 = vector.broadcast %84 : vector<1x128xi32> to vector<128x128xi32>
    %86 = arith.cmpi eq, %4, %85 : vector<128x128xi32>
    %87 = arith.extui %86 : vector<128x128xi1> to vector<128x128xi32>
    %88 = arith.sitofp %87 : vector<128x128xi32> to vector<128x128xf32>
    %89 = arith.truncf %88 : vector<128x128xf32> to vector<128x128xbf16>
    %c2_47 = arith.constant 2 : index
    %c0_48 = arith.constant 0 : index
    %c0_49 = arith.constant 0 : index
    %90 = vector.load %arg7[%c2_47, %c0_48, %c0_49] : memref<3x8x128xbf16, #tpu.memory_space<vmem>>, vector<1x8x128xbf16>
    %91 = vector.shape_cast %90 : vector<1x8x128xbf16> to vector<8x128xbf16>
    %cst_50 = arith.constant dense<0.000000e+00> : vector<8x128xf32>
    %92 = tpu.matmul %91, %89, %cst_50 {dimension_numbers = #tpu.dot_dimension_numbers<[1], [0], [0], [1], [0, 0, 1, 1], [], []>} : vector<8x128xbf16>, vector<128x128xbf16>, vector<8x128xf32> -> vector<8x128xf32>
    %93 = arith.truncf %92 : vector<8x128xf32> to vector<8x128xbf16>
    %94 = tpu.concatenate %30, %61, %93 in 0 : vector<8x128xbf16>, vector<8x128xbf16>, vector<8x128xbf16> -> vector<24x128xbf16>
    %c0_51 = arith.constant 0 : index
    %c0_52 = arith.constant 0 : index
    %95 = vector.load %arg8[%c0_51, %c0_52] : memref<32x24xbf16, #tpu.memory_space<vmem>>, vector<32x24xbf16>
    %cst_53 = arith.constant dense<0.000000e+00> : vector<32x128xf32>
    %96 = tpu.matmul %95, %94, %cst_53 {dimension_numbers = #tpu.dot_dimension_numbers<[1], [0], [0], [1], [0, 0, 1, 1], [], []>} : vector<32x24xbf16>, vector<24x128xbf16>, vector<32x128xf32> -> vector<32x128xf32>
    %c0_54 = arith.constant 0 : index
    %c0_55 = arith.constant 0 : index
    %97 = vector.load %arg9[%c0_54, %c0_55] : memref<32x1xf32, #tpu.memory_space<vmem>>, vector<32x1xf32>
    %98 = vector.broadcast %97 : vector<32x1xf32> to vector<32x128xf32>
    %99 = arith.addf %96, %98 : vector<32x128xf32>
    %c0_56 = arith.constant 0 : index
    %c0_57 = arith.constant 0 : index
    %c0_58 = arith.constant 0 : index
    %100 = vector.load %arg10[%c0_56, %c0_57, %c0_58] : memref<1x32x128xf32, #tpu.memory_space<vmem>>, vector<1x32x128xf32>
    %101 = vector.shape_cast %100 : vector<1x32x128xf32> to vector<32x128xf32>
    %102 = vector.shape_cast %99 : vector<32x128xf32> to vector<1x32x128xf32>
    tpu.vector_store %arg10[%c0_56, %c0_57, %c0_58], %102 {strides = array<i32>} : memref<1x32x128xf32, #tpu.memory_space<vmem>>, vector<1x32x128xf32>,
    %103 = tpu.concatenate %21, %52, %84 in 0 : vector<1x128xi32>, vector<1x128xi32>, vector<1x128xi32> -> vector<3x128xi32>
    %c0_59 = arith.constant 0 : index
    %c0_60 = arith.constant 0 : index
    %c0_61 = arith.constant 0 : index
    %104 = vector.load %arg11[%c0_59, %c0_60, %c0_61] : memref<1x3x128xi32, #tpu.memory_space<vmem>>, vector<1x3x128xi32>
    %105 = vector.shape_cast %104 : vector<1x3x128xi32> to vector<3x128xi32>
    %106 = vector.shape_cast %103 : vector<3x128xi32> to vector<1x3x128xi32>
    tpu.vector_store %arg11[%c0_59, %c0_60, %c0_61], %106 {strides = array<i32>} : memref<1x3x128xi32, #tpu.memory_space<vmem>>, vector<1x3x128xi32>,
    %107 = tpu.concatenate %9, %40, %72 in 0 : vector<8x128xf32>, vector<8x128xf32>, vector<8x128xf32> -> vector<24x128xf32>
    %c0_62 = arith.constant 0 : index
    %c0_63 = arith.constant 0 : index
    %c0_64 = arith.constant 0 : index
    %108 = vector.load %arg12[%c0_62, %c0_63, %c0_64] : memref<1x24x128xf32, #tpu.memory_space<vmem>>, vector<1x24x128xf32>
    %109 = vector.shape_cast %108 : vector<1x24x128xf32> to vector<24x128xf32>
    %110 = vector.shape_cast %107 : vector<24x128xf32> to vector<1x24x128xf32>
    tpu.vector_store %arg12[%c0_62, %c0_63, %c0_64], %110 {strides = array<i32>} : memref<1x24x128xf32, #tpu.memory_space<vmem>>, vector<1x24x128xf32>,
    return
  }
  func.func @transform_0(%arg0: i32, %arg1: i32) -> (i32, i32, i32) {
    %c0_i32 = arith.constant 0 : i32
    %c0_i32_0 = arith.constant 0 : i32
    return %arg0, %c0_i32, %arg1 : i32, i32, i32
  }
  func.func @transform_1(%arg0: i32, %arg1: i32) -> (i32, i32) {
    %c0_i32 = arith.constant 0 : i32
    %c0_i32_0 = arith.constant 0 : i32
    %c0_i32_1 = arith.constant 0 : i32
    return %c0_i32, %c0_i32_0 : i32, i32
  }
  func.func @transform_2(%arg0: i32, %arg1: i32) -> (i32, i32, i32) {
    %c0_i32 = arith.constant 0 : i32
    %c0_i32_0 = arith.constant 0 : i32
    %c0_i32_1 = arith.constant 0 : i32
    %c0_i32_2 = arith.constant 0 : i32
    return %c0_i32, %c0_i32_0, %c0_i32_1 : i32, i32, i32
  }
  func.func @transform_3(%arg0: i32, %arg1: i32) -> (i32, i32, i32) {
    %c0_i32 = arith.constant 0 : i32
    %c0_i32_0 = arith.constant 0 : i32
    %c0_i32_1 = arith.constant 0 : i32
    %c0_i32_2 = arith.constant 0 : i32
    return %c0_i32, %c0_i32_0, %c0_i32_1 : i32, i32, i32
  }
  func.func @transform_4(%arg0: i32, %arg1: i32) -> (i32, i32, i32) {
    %c0_i32 = arith.constant 0 : i32
    %c0_i32_0 = arith.constant 0 : i32
    %c0_i32_1 = arith.constant 0 : i32
    %c0_i32_2 = arith.constant 0 : i32
    return %c0_i32, %c0_i32_0, %c0_i32_1 : i32, i32, i32
  }
  func.func @transform_5(%arg0: i32, %arg1: i32) -> (i32, i32, i32) {
    %c0_i32 = arith.constant 0 : i32
    %c0_i32_0 = arith.constant 0 : i32
    %c0_i32_1 = arith.constant 0 : i32
    %c0_i32_2 = arith.constant 0 : i32
    return %c0_i32, %c0_i32_0, %c0_i32_1 : i32, i32, i32
  }
  func.func @transform_6(%arg0: i32, %arg1: i32) -> (i32, i32) {
    %c0_i32 = arith.constant 0 : i32
    %c0_i32_0 = arith.constant 0 : i32
    %c0_i32_1 = arith.constant 0 : i32
    return %c0_i32, %c0_i32_0 : i32, i32
  }
  func.func @transform_7(%arg0: i32, %arg1: i32) -> (i32, i32) {
    %c0_i32 = arith.constant 0 : i32
    %c0_i32_0 = arith.constant 0 : i32
    %c0_i32_1 = arith.constant 0 : i32
    return %c0_i32, %c0_i32_0 : i32, i32
  }
  func.func @transform_8(%arg0: i32, %arg1: i32) -> (i32, i32, i32) {
    %c0_i32 = arith.constant 0 : i32
    %c0_i32_0 = arith.constant 0 : i32
    return %arg0, %c0_i32, %arg1 : i32, i32, i32
  }
  func.func @transform_9(%arg0: i32, %arg1: i32) -> (i32, i32, i32) {
    %c0_i32 = arith.constant 0 : i32
    %c0_i32_0 = arith.constant 0 : i32
    return %arg0, %c0_i32, %arg1 : i32, i32, i32
  }
  func.func @transform_10(%arg0: i32, %arg1: i32) -> (i32, i32, i32) {
    %c0_i32 = arith.constant 0 : i32
    %c0_i32_0 = arith.constant 0 : i32
    return %arg0, %c0_i32, %arg1 : i32, i32, i32
  }
}

</mosaic_0001>

<llo_original>
// kernel: tpu_custom_call.1
$region0: #{tpu_custom_call.1}
  #allocation0 [shape = 'u32[]', space=smem, size = 0x4, offset = 0x4, fixed_abs, tag = 'smem constant byte address 0x4 - core index']
  #allocation1 [shape = 'u32[144,128]{1,0:T(1,128)}', space=vmem, size = 0x12000, scoped, tag = 'internal scratch']
  %s0 = inlined_call_operand.vmem [shape: bf16[2,32,384], index: 0, kind: input, shape index: {}]
  %s1 = inlined_call_operand.vmem [shape: bf16[24,32], index: 1, kind: input, shape index: {}]
  %s2 = inlined_call_operand.vmem [shape: f32[3,8,1], index: 2, kind: input, shape index: {}]
  %s3 = inlined_call_operand.vmem [shape: bf16[3,8,24], index: 3, kind: input, shape index: {}]
  %s4 = inlined_call_operand.vmem [shape: bf16[3,128,8], index: 4, kind: input, shape index: {}]
  %s5 = inlined_call_operand.vmem [shape: bf16[3,8,128], index: 5, kind: input, shape index: {}]
  %s6 = inlined_call_operand.vmem [shape: bf16[32,24], index: 6, kind: input, shape index: {}]
  %s7 = inlined_call_operand.vmem [shape: f32[32,1], index: 7, kind: input, shape index: {}]
  %s8 = inlined_call_operand.hbm [shape: f32[2,32,384], index: 8, kind: output, shape index: {0}]
  %s9 = inlined_call_operand.vmem [shape: s32[2,3,384], index: 9, kind: output, shape index: {1}]
  %s10 = inlined_call_operand.hbm [shape: f32[2,24,384], index: 10, kind: output, shape index: {2}]
  %11 = xla_tuple %s8, %s9, %s10
  %s12 = sld [smem:[#allocation0]]
  $region122: #{tpu_custom_call.1} parent=0
    _
  %s14 = ssub.s32 1, %s12
  %s15 = scalar_select 0, %s14, %s12
  $region1: #{tpu_custom_call.1} parent=0
    #allocation2 [shape = 'u8[16384]{0}', space=vmem, size = 0x4000, scoped, tag = 'input window, operand 0']
    #allocation3 [shape = 'u8[32768]{0}', space=vmem, size = 0x8000, scoped, tag = 'output window, operand 0']
    #allocation4 [shape = 's32[2]{0}', space=sflag, size = 0x8, scoped, tag = 'scoped memory for tpu_custom_call.1']
    #allocation5 [shape = 'u8[24576]{0}', space=vmem, size = 0x6000, scoped, tag = 'output window, operand 2']
    #allocation6 [shape = 's32[2]{0}', space=sflag, size = 0x8, scoped, tag = 'scoped memory for tpu_custom_call.1']
    %16 = vsyncpa [#allocation4], 0
    %s17 = scalar_lea.sflag [#allocation4], 1
    %18 = vsyncpa %s17, 0
    %19 = vsyncpa [#allocation6], 0
    %s20 = scalar_lea.sflag [#allocation6], 1
    %21 = vsyncpa %s20, 0
    loop: start=0, step=1, limit=8
    $region2: #{tpu_custom_call.1} parent=1 // loop_pre_header
      _
    $region3: #{tpu_custom_call.1} parent=1 // loop_header
      %s23 = sphi 0, %s27
      %p24 = scmp.ge.s32.totalorder %s23, 8
      %s30 = sphi 0, %s42
      %s31 = sphi 0, %s38
      %s32 = sphi 0, %s30
      %s33 = sphi 0, %s31
      %s34 = sphi 0, %s32
      %s35 = sphi 0, %s33
      %s47 = sphi 0, %s49
      %s50 = sphi 0, %s47
      %s51 = sphi 0, %s50
      %s67 = sphi 0, %s51
      %s71 = sphi 0, %s71
      %s73 = sphi 0, %s71
      %s74 = sphi 0, %s73
      %s88 = sphi 0, %s74
      %s92 = sphi 0, %s92
      %s94 = sphi 0, %s92
      %s95 = sphi 0, %s94
      %s109 = sphi 0, %s95
      %s113 = sphi 0, %s113
      %s115 = sphi 0, %s113
      %s116 = sphi 0, %s115
      %s130 = sphi 0, %s116
      %s134 = sphi 0, %s134
      %s136 = sphi 0, %s134
      %s137 = sphi 0, %s136
      %s151 = sphi 0, %s137
      %s155 = sphi 0, %s155
      %s157 = sphi 0, %s155
      %s158 = sphi 0, %s157
      %s172 = sphi 0, %s158
      %s176 = sphi 0, %s176
      %s178 = sphi 0, %s176
      %s179 = sphi 0, %s178
      %s193 = sphi 0, %s179
      %s197 = sphi 0, %s197
      %s199 = sphi 0, %s197
      %s200 = sphi 0, %s199
      %s214 = sphi 0, %s200
      %s222 = sphi 0, %s224
      %s225 = sphi 0, %s222
      %s226 = sphi 0, %s225
      %s242 = sphi 0, %s226
      %s250 = sphi 0, %s252
      %s253 = sphi 0, %s250
      %s254 = sphi 0, %s253
      %s270 = sphi 0, %s254
      %s278 = sphi 0, %s280
      %s281 = sphi 0, %s278
      %s282 = sphi 0, %s281
      %s298 = sphi 0, %s282
    $region4: #{tpu_custom_call.1} parent=1 // loop_header_branch
      %26 = sbr.rel (%p24) target = $region8
    $region5: #{tpu_custom_call.1} parent=1 // loop_body
      %s28 = ssub.s32 %s23, 1
      %s29 = ssub.s32 %s23, 2
      %s36 = sadd.s32 1, %s31
      %p37 = scmp.ge.s32.totalorder %s36, 3
      %s38 = scalar_select %p37, 0, %s36
      %s39 = sadd.s32 1, %s30
      %s40 = scalar_select %p37, %s39, %s30
      %p41 = scmp.ge.s32.totalorder %s40, 2
      %s42 = scalar_select %p41, 0, %s40
      %s43 = ssub.s32 %s30, %s42
      %s44 = ssub.s32 %s31, %s38
      %s45 = sor.u32 %s43, %s44
      %p46 = scmp.eq.s32.totalorder %s45, 0
      %s48 = sadd.s32 %s47, 1
      %s49 = scalar_select %p46, %s47, %s48
      %p52 = pneg %p46
      %p53 = scmp.eq.s32.totalorder %s23, 5
      %p54 = por %p52, %p53
      %p55 = scmp.ne.s32.totalorder %s47, %s50
      %p56 = scmp.eq.s32.totalorder %s23, 0
      %p57 = por %p55, %p56
      %p58 = scmp.ne.s32.totalorder %s47, %s50
      %p59 = scmp.eq.s32.totalorder %s28, 5
      %p60 = por %p58, %p59
      %p61 = scmp.ne.s32.totalorder %s50, %s51
      %p62 = scmp.eq.s32.totalorder %s28, 0
      %p63 = por %p61, %p62
      %p64 = scmp.ne.s32.totalorder %s50, %s51
      %p65 = scmp.eq.s32.totalorder %s29, 5
      %p66 = por %p64, %p65
      %p68 = scmp.ne.s32.totalorder %s51, %s67
      %p69 = scmp.eq.s32.totalorder %s29, 0
      %p70 = por %p68, %p69
      %s72 = sadd.s32 %s71, 1
      %p75 = scmp.eq.s32.totalorder %s23, 5
      %p76 = scmp.ne.s32.totalorder %s71, %s73
      %p77 = scmp.eq.s32.totalorder %s23, 0
      %p78 = por %p76, %p77
      %p79 = scmp.ne.s32.totalorder %s71, %s73
      %p80 = scmp.eq.s32.totalorder %s28, 5
      %p81 = por %p79, %p80
      %p82 = scmp.ne.s32.totalorder %s73, %s74
      %p83 = scmp.eq.s32.totalorder %s28, 0
      %p84 = por %p82, %p83
      %p85 = scmp.ne.s32.totalorder %s73, %s74
      %p86 = scmp.eq.s32.totalorder %s29, 5
      %p87 = por %p85, %p86
      %p89 = scmp.ne.s32.totalorder %s74, %s88
      %p90 = scmp.eq.s32.totalorder %s29, 0
      %p91 = por %p89, %p90
      %s93 = sadd.s32 %s92, 1
      %p96 = scmp.eq.s32.totalorder %s23, 5
      %p97 = scmp.ne.s32.totalorder %s92, %s94
      %p98 = scmp.eq.s32.totalorder %s23, 0
      %p99 = por %p97, %p98
      %p100 = scmp.ne.s32.totalorder %s92, %s94
      %p101 = scmp.eq.s32.totalorder %s28, 5
      %p102 = por %p100, %p101
      %p103 = scmp.ne.s32.totalorder %s94, %s95
      %p104 = scmp.eq.s32.totalorder %s28, 0
      %p105 = por %p103, %p104
      %p106 = scmp.ne.s32.totalorder %s94, %s95
      %p107 = scmp.eq.s32.totalorder %s29, 5
      %p108 = por %p106, %p107
      %p110 = scmp.ne.s32.totalorder %s95, %s109
      %p111 = scmp.eq.s32.totalorder %s29, 0
      %p112 = por %p110, %p111
      %s114 = sadd.s32 %s113, 1
      %p117 = scmp.eq.s32.totalorder %s23, 5
      %p118 = scmp.ne.s32.totalorder %s113, %s115
      %p119 = scmp.eq.s32.totalorder %s23, 0
      %p120 = por %p118, %p119
      %p121 = scmp.ne.s32.totalorder %s113, %s115
      %p122 = scmp.eq.s32.totalorder %s28, 5
      %p123 = por %p121, %p122
      %p124 = scmp.ne.s32.totalorder %s115, %s116
      %p125 = scmp.eq.s32.totalorder %s28, 0
      %p126 = por %p124, %p125
      %p127 = scmp.ne.s32.totalorder %s115, %s116
      %p128 = scmp.eq.s32.totalorder %s29, 5
      %p129 = por %p127, %p128
      %p131 = scmp.ne.s32.totalorder %s116, %s130
      %p132 = scmp.eq.s32.totalorder %s29, 0
      %p133 = por %p131, %p132
      %s135 = sadd.s32 %s134, 1
      %p138 = scmp.eq.s32.totalorder %s23, 5
      %p139 = scmp.ne.s32.totalorder %s134, %s136
      %p140 = scmp.eq.s32.totalorder %s23, 0
      %p141 = por %p139, %p140
      %p142 = scmp.ne.s32.totalorder %s134, %s136
      %p143 = scmp.eq.s32.totalorder %s28, 5
      %p144 = por %p142, %p143
      %p145 = scmp.ne.s32.totalorder %s136, %s137
      %p146 = scmp.eq.s32.totalorder %s28, 0
      %p147 = por %p145, %p146
      %p148 = scmp.ne.s32.totalorder %s136, %s137
      %p149 = scmp.eq.s32.totalorder %s29, 5
      %p150 = por %p148, %p149
      %p152 = scmp.ne.s32.totalorder %s137, %s151
      %p153 = scmp.eq.s32.totalorder %s29, 0
      %p154 = por %p152, %p153
      %s156 = sadd.s32 %s155, 1
      %p159 = scmp.eq.s32.totalorder %s23, 5
      %p160 = scmp.ne.s32.totalorder %s155, %s157
      %p161 = scmp.eq.s32.totalorder %s23, 0
      %p162 = por %p160, %p161
      %p163 = scmp.ne.s32.totalorder %s155, %s157
      %p164 = scmp.eq.s32.totalorder %s28, 5
      %p165 = por %p163, %p164
      %p166 = scmp.ne.s32.totalorder %s157, %s158
      %p167 = scmp.eq.s32.totalorder %s28, 0
      %p168 = por %p166, %p167
      %p169 = scmp.ne.s32.totalorder %s157, %s158
      %p170 = scmp.eq.s32.totalorder %s29, 5
      %p171 = por %p169, %p170
      %p173 = scmp.ne.s32.totalorder %s158, %s172
      %p174 = scmp.eq.s32.totalorder %s29, 0
      %p175 = por %p173, %p174
      %s177 = sadd.s32 %s176, 1
      %p180 = scmp.eq.s32.totalorder %s23, 5
      %p181 = scmp.ne.s32.totalorder %s176, %s178
      %p182 = scmp.eq.s32.totalorder %s23, 0
      %p183 = por %p181, %p182
      %p184 = scmp.ne.s32.totalorder %s176, %s178
      %p185 = scmp.eq.s32.totalorder %s28, 5
      %p186 = por %p184, %p185
      %p187 = scmp.ne.s32.totalorder %s178, %s179
      %p188 = scmp.eq.s32.totalorder %s28, 0
      %p189 = por %p187, %p188
      %p190 = scmp.ne.s32.totalorder %s178, %s179
      %p191 = scmp.eq.s32.totalorder %s29, 5
      %p192 = por %p190, %p191
      %p194 = scmp.ne.s32.totalorder %s179, %s193
      %p195 = scmp.eq.s32.totalorder %s29, 0
      %p196 = por %p194, %p195
      %s198 = sadd.s32 %s197, 1
      %p201 = scmp.eq.s32.totalorder %s23, 5
      %p202 = scmp.ne.s32.totalorder %s197, %s199
      %p203 = scmp.eq.s32.totalorder %s23, 0
      %p204 = por %p202, %p203
      %p205 = scmp.ne.s32.totalorder %s197, %s199
      %p206 = scmp.eq.s32.totalorder %s28, 5
      %p207 = por %p205, %p206
      %p208 = scmp.ne.s32.totalorder %s199, %s200
      %p209 = scmp.eq.s32.totalorder %s28, 0
      %p210 = por %p208, %p209
      %p211 = scmp.ne.s32.totalorder %s199, %s200
      %p212 = scmp.eq.s32.totalorder %s29, 5
      %p213 = por %p211, %p212
      %p215 = scmp.ne.s32.totalorder %s200, %s214
      %p216 = scmp.eq.s32.totalorder %s29, 0
      %p217 = por %p215, %p216
      %s218 = ssub.s32 %s30, %s42
      %s219 = ssub.s32 %s31, %s38
      %s220 = sor.u32 %s218, %s219
      %p221 = scmp.eq.s32.totalorder %s220, 0
      %s223 = sadd.s32 %s222, 1
      %s224 = scalar_select %p221, %s222, %s223
      %p227 = pneg %p221
      %p228 = scmp.eq.s32.totalorder %s23, 5
      %p229 = por %p227, %p228
      %p230 = scmp.ne.s32.totalorder %s222, %s225
      %p231 = scmp.eq.s32.totalorder %s23, 0
      %p232 = por %p230, %p231
      %p233 = scmp.ne.s32.totalorder %s222, %s225
      %p234 = scmp.eq.s32.totalorder %s28, 5
      %p235 = por %p233, %p234
      %p236 = scmp.ne.s32.totalorder %s225, %s226
      %p237 = scmp.eq.s32.totalorder %s28, 0
      %p238 = por %p236, %p237
      %p239 = scmp.ne.s32.totalorder %s225, %s226
      %p240 = scmp.eq.s32.totalorder %s29, 5
      %p241 = por %p239, %p240
      %p243 = scmp.ne.s32.totalorder %s226, %s242
      %p244 = scmp.eq.s32.totalorder %s29, 0
      %p245 = por %p243, %p244
      %s246 = ssub.s32 %s30, %s42
      %s247 = ssub.s32 %s31, %s38
      %s248 = sor.u32 %s246, %s247
      %p249 = scmp.eq.s32.totalorder %s248, 0
      %s251 = sadd.s32 %s250, 1
      %s252 = scalar_select %p249, %s250, %s251
      %p255 = pneg %p249
      %p256 = scmp.eq.s32.totalorder %s23, 5
      %p257 = por %p255, %p256
      %p258 = scmp.ne.s32.totalorder %s250, %s253
      %p259 = scmp.eq.s32.totalorder %s23, 0
      %p260 = por %p258, %p259
      %p261 = scmp.ne.s32.totalorder %s250, %s253
      %p262 = scmp.eq.s32.totalorder %s28, 5
      %p263 = por %p261, %p262
      %p264 = scmp.ne.s32.totalorder %s253, %s254
      %p265 = scmp.eq.s32.totalorder %s28, 0
      %p266 = por %p264, %p265
      %p267 = scmp.ne.s32.totalorder %s253, %s254
      %p268 = scmp.eq.s32.totalorder %s29, 5
      %p269 = por %p267, %p268
      %p271 = scmp.ne.s32.totalorder %s254, %s270
      %p272 = scmp.eq.s32.totalorder %s29, 0
      %p273 = por %p271, %p272
      %s274 = ssub.s32 %s30, %s42
      %s275 = ssub.s32 %s31, %s38
      %s276 = sor.u32 %s274, %s275
      %p277 = scmp.eq.s32.totalorder %s276, 0
      %s279 = sadd.s32 %s278, 1
      %s280 = scalar_select %p277, %s278, %s279
      %p283 = pneg %p277
      %p284 = scmp.eq.s32.totalorder %s23, 5
      %p285 = por %p283, %p284
      %p286 = scmp.ne.s32.totalorder %s278, %s281
      %p287 = scmp.eq.s32.totalorder %s23, 0
      %p288 = por %p286, %p287
      %p289 = scmp.ne.s32.totalorder %s278, %s281
      %p290 = scmp.eq.s32.totalorder %s28, 5
      %p291 = por %p289, %p290
      %p292 = scmp.ne.s32.totalorder %s281, %s282
      %p293 = scmp.eq.s32.totalorder %s28, 0
      %p294 = por %p292, %p293
      %p295 = scmp.ne.s32.totalorder %s281, %s282
      %p296 = scmp.eq.s32.totalorder %s29, 5
      %p297 = por %p295, %p296
      %p299 = scmp.ne.s32.totalorder %s282, %s298
      %p300 = scmp.eq.s32.totalorder %s29, 0
      %p301 = por %p299, %p300
      %p302 = scmp.le.s32.totalorder 1, %s23
      %p303 = scmp.lt.s32.totalorder %s23, 7
      %p304 = pnand %p302, %p303
      %p305 = pneg %p304
      // Predicated region
      $region9: #{tpu_custom_call.1} parent=5 // pred_check
        _
      $region10: #{tpu_custom_call.1} parent=5 // pred_check_branch
        %307 = sbr.rel (%p304) target = $region12
      $region11: #{tpu_custom_call.1} parent=5 // pred_region
        %s308 = ssub.s32 %s23, 1
        // Predicated region
        $region13: #{tpu_custom_call.1} parent=11 // pred_check
          %p309 = pneg %p84
        $region14: #{tpu_custom_call.1} parent=11 // pred_check_branch
          %311 = sbr.rel (%p309) target = $region16
        $region15: #{tpu_custom_call.1} parent=11 // pred_region
          _
        $region16: #{tpu_custom_call.1} parent=11 // pred_fallthru
          _
        // Predicated region
        $region17: #{tpu_custom_call.1} parent=11 // pred_check
          %p312 = pneg %p105
        $region18: #{tpu_custom_call.1} parent=11 // pred_check_branch
          %314 = sbr.rel (%p312) target = $region20
        $region19: #{tpu_custom_call.1} parent=11 // pred_region
          _
        $region20: #{tpu_custom_call.1} parent=11 // pred_fallthru
          _
        // Predicated region
        $region21: #{tpu_custom_call.1} parent=11 // pred_check
          %p315 = pneg %p126
        $region22: #{tpu_custom_call.1} parent=11 // pred_check_branch
          %317 = sbr.rel (%p315) target = $region24
        $region23: #{tpu_custom_call.1} parent=11 // pred_region
          _
        $region24: #{tpu_custom_call.1} parent=11 // pred_fallthru
          _
        // Predicated region
        $region25: #{tpu_custom_call.1} parent=11 // pred_check
          %p318 = pneg %p147
        $region26: #{tpu_custom_call.1} parent=11 // pred_check_branch
          %320 = sbr.rel (%p318) target = $region28
        $region27: #{tpu_custom_call.1} parent=11 // pred_region
          _
        $region28: #{tpu_custom_call.1} parent=11 // pred_fallthru
          _
        // Predicated region
        $region29: #{tpu_custom_call.1} parent=11 // pred_check
          %p321 = pneg %p168
        $region30: #{tpu_custom_call.1} parent=11 // pred_check_branch
          %323 = sbr.rel (%p321) target = $region32
        $region31: #{tpu_custom_call.1} parent=11 // pred_region
          _
        $region32: #{tpu_custom_call.1} parent=11 // pred_fallthru
          _
        // Predicated region
        $region33: #{tpu_custom_call.1} parent=11 // pred_check
          %p324 = pneg %p189
        $region34: #{tpu_custom_call.1} parent=11 // pred_check_branch
          %326 = sbr.rel (%p324) target = $region36
        $region35: #{tpu_custom_call.1} parent=11 // pred_region
          _
        $region36: #{tpu_custom_call.1} parent=11 // pred_fallthru
          _
        // Predicated region
        $region37: #{tpu_custom_call.1} parent=11 // pred_check
          %p327 = pneg %p210
        $region38: #{tpu_custom_call.1} parent=11 // pred_check_branch
          %329 = sbr.rel (%p327) target = $region40
        $region39: #{tpu_custom_call.1} parent=11 // pred_region
          _
        $region40: #{tpu_custom_call.1} parent=11 // pred_fallthru
          _
      $region12: #{tpu_custom_call.1} parent=5 // pred_fallthru
        _
      %p330 = scmp.lt.s32.totalorder %s23, 6
      // Predicated region
      $region41: #{tpu_custom_call.1} parent=5 // pred_check
        %p331 = pneg %p330
      $region42: #{tpu_custom_call.1} parent=5 // pred_check_branch
        %333 = sbr.rel (%p331) target = $region44
      $region43: #{tpu_custom_call.1} parent=5 // pred_region
        // Predicated region
        $region45: #{tpu_custom_call.1} parent=43 // pred_check
          %p334 = pneg %p57
        $region46: #{tpu_custom_call.1} parent=43 // pred_check_branch
          %336 = sbr.rel (%p334) target = $region48
        $region47: #{tpu_custom_call.1} parent=43 // pred_region
          %s337 = sand.u32 %s47, 1
          %s338 = sand.u32 %s47, 1
          %s339 = smul.addr %s338, 16
          %s340 = scalar_lea.vmem [#allocation2], %s339
          %s341 = smul.addr %s30, 12
          %s342 = sadd.s32 %s31, %s341
          %s343 = smul.addr %s342, 4
          %s344 = scalar_lea.vmem %s0, %s343
          // Predicated region
          $region49: #{tpu_custom_call.1} parent=47 // pred_check
            _
          $region50: #{tpu_custom_call.1} parent=47 // pred_check_branch
            %346 = sbr.rel (0) target = $region52
          $region51: #{tpu_custom_call.1} parent=47 // pred_region
            // Predicated region
            $region53: #{tpu_custom_call.1} parent=51 // pred_check
              _
            $region54: #{tpu_custom_call.1} parent=51 // pred_check_branch
              %348 = sbr.rel target = $region56
            $region55: #{tpu_custom_call.1} parent=51 // pred_region
              // Predicated region
              $region68: #{tpu_custom_call.1} parent=55 // pred_check
                _
              $region69: #{tpu_custom_call.1} parent=55 // pred_check_branch
                %370 = sbr.rel (0) target = $region71
              $region70: #{tpu_custom_call.1} parent=55 // pred_region
                loop: start=0, step=1, limit=1
                $region72: #{tpu_custom_call.1} parent=70 // loop_pre_header
                  _
                $region73: #{tpu_custom_call.1} parent=70 // loop_header
                  %s372 = sphi 0, %s376
                  %p373 = scmp.ge.s32.totalorder %s372, 1
                  %s377 = sphi %s344, %s344
                  %s378 = sphi %s340, %s340
                $region74: #{tpu_custom_call.1} parent=70 // loop_header_branch
                  %375 = sbr.rel (%p373) target = $region78
                $region75: #{tpu_custom_call.1} parent=70 // loop_body
                  _
                $region76: #{tpu_custom_call.1} parent=70 // loop_footer
                  %s376 = sadd.s32 1, %s372
                $region77: #{tpu_custom_call.1} parent=70 // loop_footer_branch
                  %371 = sbr.rel target = $region73
                $region78: #{tpu_custom_call.1} parent=70 // loop_exit
                  _
                %s380 = ssub.s32 16, 1
                loop: start=0, step=1, limit=1
                $region79: #{tpu_custom_call.1} parent=70 // loop_pre_header
                  _
                $region80: #{tpu_custom_call.1} parent=70 // loop_header
                  %s382 = sphi 0, %s386
                  %p383 = scmp.ge.s32.totalorder %s382, 1
                  %s387 = sphi %s344, %s344
                  %s388 = sphi %s340, %s340
                $region81: #{tpu_custom_call.1} parent=70 // loop_header_branch
                  %385 = sbr.rel (%p383) target = $region85
                $region82: #{tpu_custom_call.1} parent=70 // loop_body
                  %v389 = vld [vmem:[%s387] sm:%s380]
                  %390 = vst [vmem:[%s388] sm:%s380] %v389
                  %v391 = vld [vmem:[%s387 + $0xc] sm:%s380]
                  %392 = vst [vmem:[%s388 + $0x4] sm:%s380] %v391
                  %v393 = vld [vmem:[%s387 + $0x18] sm:%s380]
                  %394 = vst [vmem:[%s388 + $0x8] sm:%s380] %v393
                  %v395 = vld [vmem:[%s387 + $0x24] sm:%s380]
                  %396 = vst [vmem:[%s388 + $0xc] sm:%s380] %v395
                $region83: #{tpu_custom_call.1} parent=70 // loop_footer
                  %s386 = sadd.s32 1, %s382
                $region84: #{tpu_custom_call.1} parent=70 // loop_footer_branch
                  %381 = sbr.rel target = $region80
                $region85: #{tpu_custom_call.1} parent=70 // loop_exit
                  _
              $region71: #{tpu_custom_call.1} parent=55 // pred_fallthru
                _
            $region56: #{tpu_custom_call.1} parent=51 // pred_fallthru
              _
            // Predicated region
            $region57: #{tpu_custom_call.1} parent=51 // pred_check
              _
            $region58: #{tpu_custom_call.1} parent=51 // pred_check_branch
              %350 = sbr.rel (0) target = $region60
            $region59: #{tpu_custom_call.1} parent=51 // pred_region
              %s352 = ssub.s32 16, 1
              loop: start=0, step=1, limit=1
              $region61: #{tpu_custom_call.1} parent=59 // loop_pre_header
                _
              $region62: #{tpu_custom_call.1} parent=59 // loop_header
                %s354 = sphi 0, %s358
                %p355 = scmp.ge.s32.totalorder %s354, 1
                %s359 = sphi %s344, %s344
                %s360 = sphi %s340, %s340
              $region63: #{tpu_custom_call.1} parent=59 // loop_header_branch
                %357 = sbr.rel (%p355) target = $region67
              $region64: #{tpu_custom_call.1} parent=59 // loop_body
                %v361 = vld [vmem:[%s359] sm:%s352]
                %362 = vst [vmem:[%s360] sm:%s352] %v361
                %v363 = vld [vmem:[%s359 + $0xc] sm:%s352]
                %364 = vst [vmem:[%s360 + $0x4] sm:%s352] %v363
                %v365 = vld [vmem:[%s359 + $0x18] sm:%s352]
                %366 = vst [vmem:[%s360 + $0x8] sm:%s352] %v365
                %v367 = vld [vmem:[%s359 + $0x24] sm:%s352]
                %368 = vst [vmem:[%s360 + $0xc] sm:%s352] %v367
              $region65: #{tpu_custom_call.1} parent=59 // loop_footer
                %s358 = sadd.s32 1, %s354
              $region66: #{tpu_custom_call.1} parent=59 // loop_footer_branch
                %353 = sbr.rel target = $region62
              $region67: #{tpu_custom_call.1} parent=59 // loop_exit
                _
            $region60: #{tpu_custom_call.1} parent=51 // pred_fallthru
              _
          $region52: #{tpu_custom_call.1} parent=47 // pred_fallthru
            _
          %397 = vnop
        $region48: #{tpu_custom_call.1} parent=43 // pred_fallthru
          _
      $region44: #{tpu_custom_call.1} parent=5 // pred_fallthru
        _
      %p398 = scmp.le.s32.totalorder 1, %s23
      %p399 = scmp.lt.s32.totalorder %s23, 7
      %p400 = pnand %p398, %p399
      %p401 = pneg %p400
      // Predicated region
      $region86: #{tpu_custom_call.1} parent=5 // pred_check
        _
      $region87: #{tpu_custom_call.1} parent=5 // pred_check_branch
        %403 = sbr.rel (%p400) target = $region89
      $region88: #{tpu_custom_call.1} parent=5 // pred_region
        %s404 = ssub.s32 %s23, 1
        %s405 = sand.u32 %s50, 1
        %s406 = sand.u32 %s50, 1
        %s407 = smul.addr %s406, 16
        %s408 = scalar_lea.vmem [#allocation2], %s407
        // Predicated region
        $region90: #{tpu_custom_call.1} parent=88 // pred_check
          %p409 = pneg %p63
        $region91: #{tpu_custom_call.1} parent=88 // pred_check_branch
          %411 = sbr.rel (%p409) target = $region93
        $region92: #{tpu_custom_call.1} parent=88 // pred_region
          _
        $region93: #{tpu_custom_call.1} parent=88 // pred_fallthru
          _
        %s412 = sand.u32 %s50, 1
        %s413 = sand.u32 %s50, 1
        %s414 = smul.addr %s413, 16
        %s415 = scalar_lea.vmem [#allocation2], %s414
        %p416 = pneg %p63
        %p417 = pneg %p60
        %p418 = pneg %p84
        %p419 = pneg %p81
        %p420 = pneg %p105
        %p421 = pneg %p102
        %p422 = pneg %p126
        %p423 = pneg %p123
        %p424 = pneg %p147
        %p425 = pneg %p144
        %p426 = pneg %p168
        %p427 = pneg %p165
        %p428 = pneg %p189
        %p429 = pneg %p186
        %p430 = pneg %p210
        %p431 = pneg %p207
        %p432 = pneg %p238
        %p433 = pneg %p235
        %s434 = sand.u32 %s225, 1
        %s435 = scalar_lea.sflag [#allocation4], %s434
        %s436 = sand.u32 %s225, 1
        %s437 = smul.addr %s436, 32
        %s438 = scalar_lea.vmem [#allocation3], %s437
        %p439 = pneg %p266
        %p440 = pneg %p263
        %p441 = scmp.lt.s32.totalorder %s32, 1
        %s442 = scalar_select %p441, %s32, 1
        %p443 = scmp.lt.s32.totalorder %s33, 2
        %s444 = scalar_select %p443, %s33, 2
        %s445 = smul.addr %s442, 3
        %s446 = sadd.s32 %s444, %s445
        %s447 = smul.addr %s446, 4
        %s448 = scalar_lea.vmem %s9, %s447
        %p449 = pneg %p294
        %p450 = pneg %p291
        %s451 = sand.u32 %s281, 1
        %s452 = scalar_lea.sflag [#allocation6], %s451
        %s453 = sand.u32 %s281, 1
        %s454 = smul.addr %s453, 24
        %s455 = scalar_lea.vmem [#allocation5], %s454
        %p456 = scmp.lt.s32.totalorder %s32, 1
        %s457 = scalar_select %p456, %s32, 1
        %p458 = scmp.lt.s32.totalorder %s33, 2
        %s459 = scalar_select %p458, %s33, 2
        %s460 = smul.addr %s457, 3
        %s461 = sadd.s32 %s459, %s460
        %s462 = smul.addr %s461, 4
        %s463 = scalar_lea.vmem %s9, %s462
        %v465 = vld [vmem:[%s408] sm:$0xf]
        %v466 = vld [vmem:[%s408 + $0x4] sm:$0xf]
        %v467 = vld [vmem:[%s408 + $0x8] sm:$0xf]
        %v468 = vld [vmem:[%s408 + $0xc] sm:$0xf]
        %v469 = vld [vmem:[%s1] sm:$0xf]
        %v470 = vld [vmem:[%s1 + $0x4] sm:$0xf]
        %v471 = vld [vmem:[%s1 + $0x8] sm:$0xf]
        %v475 = vunpack.c.l.b16 %v469
        %v476 = vunpack.c.l.b16 %v470
        %v477 = vunpack.c.l.b16 %v471
        %v478 = vpack.c.b16 %v476, %v475
        %v479 = vpack.c.b16 %v477, %v477
        %v484 = vunpack.c.l.b16 %v465
        %v485 = vunpack.c.l.b16 %v466
        %v486 = vunpack.c.l.b16 %v467
        %v487 = vunpack.c.l.b16 %v468
        %v488 = vpack.c.b16 %v485, %v484
        %v489 = vpack.c.b16 %v487, %v486
        %vm492 = vcmask 261120
        %v494 = vsel %vm492, %v478, 0
        %v497 = vsel %vm492, %v479, 0
        %499 = vmatprep.subr.bf16.mxu0 0
        %500 = vmatpush1.bf16.msra.mxu0 0
        %501 = vmatprep.subr.bf16.mxu0 0
        %502 = vmatpush1.bf16.msra.mxu0 0
        %503 = vmatprep.subr.bf16.mxu0 0
        %504 = vmatpush1.bf16.msra.mxu0 0
        %505 = vmatprep.subr.bf16.mxu0 0
        %506 = vmatpush1.bf16.msra.mxu0 0
        %507 = vmatprep.subr.bf16.mxu0 0
        %508 = vmatpush1.bf16.msra.mxu0 0
        %509 = vmatprep.subr.bf16.mxu0 0
        %510 = vmatpush1.bf16.msra.mxu0 0
        %511 = vmatprep.subr.bf16.mxu0 0
        %512 = vmatpush1.bf16.msra.mxu0 %v489
        %513 = vmatprep.subr.bf16.mxu0 0
        %514 = vmatpush1.bf16.msra.mxu0 %v488
        %515 = vmatprep.subr.bf16.mxu0 0
        %516 = vmatpush2.bf16.msra.mxu0 0
        %517 = vmatprep.subr.bf16.mxu0 0
        %518 = vmatpush2.bf16.msra.mxu0 0
        %519 = vmatprep.subr.bf16.mxu0 0
        %520 = vmatpush2.bf16.msra.mxu0 0
        %521 = vmatprep.subr.bf16.mxu0 0
        %522 = vmatpush2.bf16.msra.mxu0 0
        %523 = vmatprep.subr.bf16.mxu0 0
        %524 = vmatpush2.bf16.msra.mxu0 0
        %525 = vmatprep.subr.bf16.mxu0 0
        %526 = vmatpush2.bf16.msra.mxu0 0
        %527 = vmatprep.subr.bf16.mxu0 0
        %528 = vmatpush2.bf16.msra.mxu0 0
        %529 = vmatprep.subr.bf16.mxu0 0
        %530 = vmatpush2.bf16.msra.mxu0 0
        %531 = vmatprep.mubr.bf16.mxu0 0
        %532 = vmatmul.mubr.bf16.gmra.mxu0 %v494
        %v533 = vpop.f32.mrf.mxu0
        %v534 = vadd.f32 0.0, %v533
        %v535 = vpop.f32.mrf.mxu0
        %v536 = vpop.f32.mrf.mxu0
        %v537 = vadd.f32 0.0, %v536
        %v538 = vpop.f32.mrf.mxu0
        %539 = vmatprep.mubr.bf16.mxu0 0
        %540 = vmatmul.mubr.bf16.gmra.mxu0 %v497
        %v541 = vpop.f32.mrf.mxu0
        %v542 = vadd.f32 0.0, %v541
        %v543 = vpop.f32.mrf.mxu0
        %v544 = vpop.f32.mrf.mxu0
        %v545 = vpop.f32.mrf.mxu0
        %546 = vdwg.mxu0
        %v547 = vlaneseq
        %v548 = vshrl.u32 %v547, 7
        %v549 = vadd.s32 %v548, 8
        %v550 = vadd.s32 %v548, 16
        %v551 = vadd.s32 %v548, 24
        %v552 = vadd.s32 %v548, 32
        %v553 = vadd.s32 %v548, 40
        %v554 = vadd.s32 %v548, 48
        %v555 = vadd.s32 %v548, 56
        %v556 = vadd.s32 %v548, 64
        %v557 = vadd.s32 %v548, 72
        %v558 = vadd.s32 %v548, 80
        %v559 = vadd.s32 %v548, 88
        %v560 = vadd.s32 %v548, 96
        %v561 = vadd.s32 %v548, 104
        %v562 = vadd.s32 %v548, 112
        %v563 = vadd.s32 %v548, 120
        %v564 = vld [vmem:[%s2] sm:$0xff]
        %566 = vset.pattern.permute.xlu0 0
        %567 = vperm.xlu0 %566, %v564
        %v568 = vpop.permute.xlu0 %567
        %v570 = vadd.f32 %v534, %v568
        %v571 = vld [vmem:[%s4] sm:$0xf]
        %v572 = vld [vmem:[%s4 + $0x4] sm:$0xf]
        %v573 = vld [vmem:[%s4 + $0x8] sm:$0xf]
        %v574 = vld [vmem:[%s4 + $0xc] sm:$0xf]
        %v575 = vld [vmem:[%s4 + $0x10] sm:$0xf]
        %v576 = vld [vmem:[%s4 + $0x14] sm:$0xf]
        %v577 = vld [vmem:[%s4 + $0x18] sm:$0xf]
        %v578 = vld [vmem:[%s4 + $0x1c] sm:$0xf]
        %v579 = vld [vmem:[%s4 + $0x20] sm:$0xf]
        %v580 = vld [vmem:[%s4 + $0x24] sm:$0xf]
        %v581 = vld [vmem:[%s4 + $0x28] sm:$0xf]
        %v582 = vld [vmem:[%s4 + $0x2c] sm:$0xf]
        %v583 = vld [vmem:[%s4 + $0x30] sm:$0xf]
        %v584 = vld [vmem:[%s4 + $0x34] sm:$0xf]
        %v585 = vld [vmem:[%s4 + $0x38] sm:$0xf]
        %v586 = vld [vmem:[%s4 + $0x3c] sm:$0xf]
        %v587 = vpack.c.bf16 %v570, %v570
        %v604 = vunpack.c.l.b16 %v571
        %v605 = vunpack.c.l.b16 %v572
        %v606 = vunpack.c.l.b16 %v573
        %v607 = vunpack.c.l.b16 %v574
        %v608 = vunpack.c.l.b16 %v575
        %v609 = vunpack.c.l.b16 %v576
        %v610 = vunpack.c.l.b16 %v577
        %v611 = vunpack.c.l.b16 %v578
        %v612 = vunpack.c.l.b16 %v579
        %v613 = vunpack.c.l.b16 %v580
        %v614 = vunpack.c.l.b16 %v581
        %v615 = vunpack.c.l.b16 %v582
        %v616 = vunpack.c.l.b16 %v583
        %v617 = vunpack.c.l.b16 %v584
        %v618 = vunpack.c.l.b16 %v585
        %v619 = vunpack.c.l.b16 %v586
        %v620 = vpack.c.b16 %v605, %v604
        %v621 = vpack.c.b16 %v607, %v606
        %v622 = vpack.c.b16 %v609, %v608
        %v623 = vpack.c.b16 %v611, %v610
        %v624 = vpack.c.b16 %v613, %v612
        %v625 = vpack.c.b16 %v615, %v614
        %v626 = vpack.c.b16 %v617, %v616
        %v627 = vpack.c.b16 %v619, %v618
        %vm628 = vcmask 64512
        %v630 = vsel %vm628, %v620, 0
        %v633 = vsel %vm628, %v621, 0
        %v636 = vsel %vm628, %v622, 0
        %v639 = vsel %vm628, %v623, 0
        %v642 = vsel %vm628, %v624, 0
        %v645 = vsel %vm628, %v625, 0
        %v648 = vsel %vm628, %v626, 0
        %v651 = vsel %vm628, %v627, 0
        %vm653 = vcmask 1043456
        %v655 = vsel %vm653, %v587, 0
        %657 = vmatprep.subr.bf16.mxu0 0
        %658 = vmatpush1.bf16.msra.mxu0 0
        %659 = vmatprep.subr.bf16.mxu0 0
        %660 = vmatpush1.bf16.msra.mxu0 0
        %661 = vmatprep.subr.bf16.mxu0 0
        %662 = vmatpush1.bf16.msra.mxu0 0
        %663 = vmatprep.subr.bf16.mxu0 0
        %664 = vmatpush1.bf16.msra.mxu0 0
        %665 = vmatprep.subr.bf16.mxu0 0
        %666 = vmatpush1.bf16.msra.mxu0 0
        %667 = vmatprep.subr.bf16.mxu0 0
        %668 = vmatpush1.bf16.msra.mxu0 0
        %669 = vmatprep.subr.bf16.mxu0 0
        %670 = vmatpush1.bf16.msra.mxu0 0
        %671 = vmatprep.subr.bf16.mxu0 0
        %672 = vmatpush1.bf16.msra.mxu0 %v655
        %673 = vmatprep.subr.bf16.mxu0 0
        %674 = vmatpush2.bf16.msra.mxu0 0
        %675 = vmatprep.subr.bf16.mxu0 0
        %676 = vmatpush2.bf16.msra.mxu0 0
        %677 = vmatprep.subr.bf16.mxu0 0
        %678 = vmatpush2.bf16.msra.mxu0 0
        %679 = vmatprep.subr.bf16.mxu0 0
        %680 = vmatpush2.bf16.msra.mxu0 0
        %681 = vmatprep.subr.bf16.mxu0 0
        %682 = vmatpush2.bf16.msra.mxu0 0
        %683 = vmatprep.subr.bf16.mxu0 0
        %684 = vmatpush2.bf16.msra.mxu0 0
        %685 = vmatprep.subr.bf16.mxu0 0
        %686 = vmatpush2.bf16.msra.mxu0 0
        %687 = vmatprep.subr.bf16.mxu0 0
        %688 = vmatpush2.bf16.msra.mxu0 0
        %689 = vmatprep.mubr.bf16.mxu0 0
        %690 = vmatmul.mubr.bf16.gmra.mxu0 %v630
        %v691 = vpop.f32.mrf.mxu0
        %v692 = vadd.f32 0.0, %v691
        %v693 = vpop.f32.mrf.mxu0
        %v694 = vpop.f32.mrf.mxu0
        %v695 = vadd.f32 0.0, %v694
        %v696 = vpop.f32.mrf.mxu0
        %697 = vmatprep.mubr.bf16.mxu0 0
        %698 = vmatmul.mubr.bf16.gmra.mxu0 %v633
        %v699 = vpop.f32.mrf.mxu0
        %v700 = vadd.f32 0.0, %v699
        %v701 = vpop.f32.mrf.mxu0
        %v702 = vpop.f32.mrf.mxu0
        %v703 = vadd.f32 0.0, %v702
        %v704 = vpop.f32.mrf.mxu0
        %705 = vmatprep.mubr.bf16.mxu0 0
        %706 = vmatmul.mubr.bf16.gmra.mxu0 %v636
        %v707 = vpop.f32.mrf.mxu0
        %v708 = vadd.f32 0.0, %v707
        %v709 = vpop.f32.mrf.mxu0
        %v710 = vpop.f32.mrf.mxu0
        %v711 = vadd.f32 0.0, %v710
        %v712 = vpop.f32.mrf.mxu0
        %713 = vmatprep.mubr.bf16.mxu0 0
        %714 = vmatmul.mubr.bf16.gmra.mxu0 %v639
        %v715 = vpop.f32.mrf.mxu0
        %v716 = vadd.f32 0.0, %v715
        %v717 = vpop.f32.mrf.mxu0
        %v718 = vpop.f32.mrf.mxu0
        %v719 = vadd.f32 0.0, %v718
        %v720 = vpop.f32.mrf.mxu0
        %721 = vmatprep.mubr.bf16.mxu0 0
        %722 = vmatmul.mubr.bf16.gmra.mxu0 %v642
        %v723 = vpop.f32.mrf.mxu0
        %v724 = vadd.f32 0.0, %v723
        %v725 = vpop.f32.mrf.mxu0
        %v726 = vpop.f32.mrf.mxu0
        %v727 = vadd.f32 0.0, %v726
        %v728 = vpop.f32.mrf.mxu0
        %729 = vmatprep.mubr.bf16.mxu0 0
        %730 = vmatmul.mubr.bf16.gmra.mxu0 %v645
        %v731 = vpop.f32.mrf.mxu0
        %v732 = vadd.f32 0.0, %v731
        %v733 = vpop.f32.mrf.mxu0
        %v734 = vpop.f32.mrf.mxu0
        %v735 = vadd.f32 0.0, %v734
        %v736 = vpop.f32.mrf.mxu0
        %737 = vmatprep.mubr.bf16.mxu0 0
        %738 = vmatmul.mubr.bf16.gmra.mxu0 %v648
        %v739 = vpop.f32.mrf.mxu0
        %v740 = vadd.f32 0.0, %v739
        %v741 = vpop.f32.mrf.mxu0
        %v742 = vpop.f32.mrf.mxu0
        %v743 = vadd.f32 0.0, %v742
        %v744 = vpop.f32.mrf.mxu0
        %745 = vmatprep.mubr.bf16.mxu0 0
        %746 = vmatmul.mubr.bf16.gmra.mxu0 %v651
        %v747 = vpop.f32.mrf.mxu0
        %v748 = vadd.f32 0.0, %v747
        %v749 = vpop.f32.mrf.mxu0
        %v750 = vpop.f32.mrf.mxu0
        %v751 = vadd.f32 0.0, %v750
        %v752 = vpop.f32.mrf.mxu0
        %753 = vdwg.mxu0
        %v754 = vmax.f32 %v692, %v708
        %v755 = vmax.f32 %v695, %v711
        %v756 = vmax.f32 %v700, %v716
        %v757 = vmax.f32 %v703, %v719
        %v758 = vmax.f32 %v754, %v724
        %v759 = vmax.f32 %v755, %v727
        %v760 = vmax.f32 %v756, %v732
        %v761 = vmax.f32 %v757, %v735
        %v762 = vmax.f32 %v758, %v740
        %v763 = vmax.f32 %v759, %v743
        %v764 = vmax.f32 %v760, %v748
        %v765 = vmax.f32 %v761, %v751
        %v766 = vmax.f32 %v762, %v763
        %v767 = vmax.f32 %v764, %v765
        %v768 = vmax.f32 %v766, %v767
        %v769 = vrot.slane %v768, 4
        %v770 = vmax.f32 %v768, %v769
        %v771 = vrot.slane %v770, 2
        %v772 = vmax.f32 %v770, %v771
        %v773 = vrot.slane %v772, 1
        %v774 = vmax.f32 %v772, %v773
        %vm775 = vcmp.eq.f32.partialorder %v692, %v774
        %vm776 = vcmp.eq.f32.partialorder %v695, %v774
        %vm777 = vcmp.eq.f32.partialorder %v700, %v774
        %vm778 = vcmp.eq.f32.partialorder %v703, %v774
        %vm779 = vcmp.eq.f32.partialorder %v708, %v774
        %vm780 = vcmp.eq.f32.partialorder %v711, %v774
        %vm781 = vcmp.eq.f32.partialorder %v716, %v774
        %vm782 = vcmp.eq.f32.partialorder %v719, %v774
        %vm783 = vcmp.eq.f32.partialorder %v724, %v774
        %vm784 = vcmp.eq.f32.partialorder %v727, %v774
        %vm785 = vcmp.eq.f32.partialorder %v732, %v774
        %vm786 = vcmp.eq.f32.partialorder %v735, %v774
        %vm787 = vcmp.eq.f32.partialorder %v740, %v774
        %vm788 = vcmp.eq.f32.partialorder %v743, %v774
        %vm789 = vcmp.eq.f32.partialorder %v748, %v774
        %vm790 = vcmp.eq.f32.partialorder %v751, %v774
        %v791 = vsel %vm775, %v548, 128
        %v792 = vsel %vm776, %v549, 128
        %v793 = vsel %vm777, %v550, 128
        %v794 = vsel %vm778, %v551, 128
        %v795 = vsel %vm779, %v552, 128
        %v796 = vsel %vm780, %v553, 128
        %v797 = vsel %vm781, %v554, 128
        %v798 = vsel %vm782, %v555, 128
        %v799 = vsel %vm783, %v556, 128
        %v800 = vsel %vm784, %v557, 128
        %v801 = vsel %vm785, %v558, 128
        %v802 = vsel %vm786, %v559, 128
        %v803 = vsel %vm787, %v560, 128
        %v804 = vsel %vm788, %v561, 128
        %v805 = vsel %vm789, %v562, 128
        %v806 = vsel %vm790, %v563, 128
        %vm807 = vcmp.lt.s32.totalorder %v791, %v795
        %v808 = vsel %vm807, %v791, %v795
        %vm809 = vcmp.lt.s32.totalorder %v792, %v796
        %v810 = vsel %vm809, %v792, %v796
        %vm811 = vcmp.lt.s32.totalorder %v793, %v797
        %v812 = vsel %vm811, %v793, %v797
        %vm813 = vcmp.lt.s32.totalorder %v794, %v798
        %v814 = vsel %vm813, %v794, %v798
        %vm815 = vcmp.lt.s32.totalorder %v808, %v799
        %v816 = vsel %vm815, %v808, %v799
        %vm817 = vcmp.lt.s32.totalorder %v810, %v800
        %v818 = vsel %vm817, %v810, %v800
        %vm819 = vcmp.lt.s32.totalorder %v812, %v801
        %v820 = vsel %vm819, %v812, %v801
        %vm821 = vcmp.lt.s32.totalorder %v814, %v802
        %v822 = vsel %vm821, %v814, %v802
        %vm823 = vcmp.lt.s32.totalorder %v816, %v803
        %v824 = vsel %vm823, %v816, %v803
        %vm825 = vcmp.lt.s32.totalorder %v818, %v804
        %v826 = vsel %vm825, %v818, %v804
        %vm827 = vcmp.lt.s32.totalorder %v820, %v805
        %v828 = vsel %vm827, %v820, %v805
        %vm829 = vcmp.lt.s32.totalorder %v822, %v806
        %v830 = vsel %vm829, %v822, %v806
        %vm831 = vcmp.lt.s32.totalorder %v824, %v826
        %v832 = vsel %vm831, %v824, %v826
        %vm833 = vcmp.lt.s32.totalorder %v828, %v830
        %v834 = vsel %vm833, %v828, %v830
        %vm835 = vcmp.lt.s32.totalorder %v832, %v834
        %v836 = vsel %vm835, %v832, %v834
        %v837 = vrot.slane %v836, 4
        %vm838 = vcmp.lt.s32.totalorder %v836, %v837
        %v839 = vsel %vm838, %v836, %v837
        %v840 = vrot.slane %v839, 2
        %vm841 = vcmp.lt.s32.totalorder %v839, %v840
        %v842 = vsel %vm841, %v839, %v840
        %v843 = vrot.slane %v842, 1
        %vm844 = vcmp.lt.s32.totalorder %v842, %v843
        %v845 = vsel %vm844, %v842, %v843
        %vm846 = vcmp.eq.s32.totalorder %v548, %v845
        %vm847 = vcmp.eq.s32.totalorder %v549, %v845
        %vm848 = vcmp.eq.s32.totalorder %v550, %v845
        %vm849 = vcmp.eq.s32.totalorder %v551, %v845
        %vm850 = vcmp.eq.s32.totalorder %v552, %v845
        %vm851 = vcmp.eq.s32.totalorder %v553, %v845
        %vm852 = vcmp.eq.s32.totalorder %v554, %v845
        %vm853 = vcmp.eq.s32.totalorder %v555, %v845
        %vm854 = vcmp.eq.s32.totalorder %v556, %v845
        %vm855 = vcmp.eq.s32.totalorder %v557, %v845
        %vm856 = vcmp.eq.s32.totalorder %v558, %v845
        %vm857 = vcmp.eq.s32.totalorder %v559, %v845
        %vm858 = vcmp.eq.s32.totalorder %v560, %v845
        %vm859 = vcmp.eq.s32.totalorder %v561, %v845
        %vm860 = vcmp.eq.s32.totalorder %v562, %v845
        %vm861 = vcmp.eq.s32.totalorder %v563, %v845
        %v862 = vsel %vm846, 1, 0
        %v863 = vsel %vm847, 1, 0
        %v864 = vsel %vm848, 1, 0
        %v865 = vsel %vm849, 1, 0
        %v866 = vsel %vm850, 1, 0
        %v867 = vsel %vm851, 1, 0
        %v868 = vsel %vm852, 1, 0
        %v869 = vsel %vm853, 1, 0
        %v870 = vsel %vm854, 1, 0
        %v871 = vsel %vm855, 1, 0
        %v872 = vsel %vm856, 1, 0
        %v873 = vsel %vm857, 1, 0
        %v874 = vsel %vm858, 1, 0
        %v875 = vsel %vm859, 1, 0
        %v876 = vsel %vm860, 1, 0
        %v877 = vsel %vm861, 1, 0
        %v878 = vcvt.s32.f32 %v862
        %v879 = vcvt.s32.f32 %v863
        %v880 = vcvt.s32.f32 %v864
        %v881 = vcvt.s32.f32 %v865
        %v882 = vcvt.s32.f32 %v866
        %v883 = vcvt.s32.f32 %v867
        %v884 = vcvt.s32.f32 %v868
        %v885 = vcvt.s32.f32 %v869
        %v886 = vcvt.s32.f32 %v870
        %v887 = vcvt.s32.f32 %v871
        %v888 = vcvt.s32.f32 %v872
        %v889 = vcvt.s32.f32 %v873
        %v890 = vcvt.s32.f32 %v874
        %v891 = vcvt.s32.f32 %v875
        %v892 = vcvt.s32.f32 %v876
        %v893 = vcvt.s32.f32 %v877
        %v894 = vpack.c.bf16 %v879, %v878
        %v895 = vpack.c.bf16 %v881, %v880
        %v896 = vpack.c.bf16 %v883, %v882
        %v897 = vpack.c.bf16 %v885, %v884
        %v898 = vpack.c.bf16 %v887, %v886
        %v899 = vpack.c.bf16 %v889, %v888
        %v900 = vpack.c.bf16 %v891, %v890
        %v901 = vpack.c.bf16 %v893, %v892
        %v902 = vld [vmem:[%s5] sm:$0xf]
        %903 = vmatprep.subr.bf16.mxu0 0
        %904 = vmatpush1.bf16.msra.mxu0 %v901
        %905 = vmatprep.subr.bf16.mxu0 0
        %906 = vmatpush1.bf16.msra.mxu0 %v900
        %907 = vmatprep.subr.bf16.mxu0 0
        %908 = vmatpush1.bf16.msra.mxu0 %v899
        %909 = vmatprep.subr.bf16.mxu0 0
        %910 = vmatpush1.bf16.msra.mxu0 %v898
        %911 = vmatprep.subr.bf16.mxu0 0
        %912 = vmatpush1.bf16.msra.mxu0 %v897
        %913 = vmatprep.subr.bf16.mxu0 0
        %914 = vmatpush1.bf16.msra.mxu0 %v896
        %915 = vmatprep.subr.bf16.mxu0 0
        %916 = vmatpush1.bf16.msra.mxu0 %v895
        %917 = vmatprep.subr.bf16.mxu0 0
        %918 = vmatpush1.bf16.msra.mxu0 %v894
        %919 = vmatprep.subr.bf16.mxu0 0
        %920 = vmatpush2.bf16.msra.mxu0 0
        %921 = vmatprep.subr.bf16.mxu0 0
        %922 = vmatpush2.bf16.msra.mxu0 0
        %923 = vmatprep.subr.bf16.mxu0 0
        %924 = vmatpush2.bf16.msra.mxu0 0
        %925 = vmatprep.subr.bf16.mxu0 0
        %926 = vmatpush2.bf16.msra.mxu0 0
        %927 = vmatprep.subr.bf16.mxu0 0
        %928 = vmatpush2.bf16.msra.mxu0 0
        %929 = vmatprep.subr.bf16.mxu0 0
        %930 = vmatpush2.bf16.msra.mxu0 0
        %931 = vmatprep.subr.bf16.mxu0 0
        %932 = vmatpush2.bf16.msra.mxu0 0
        %933 = vmatprep.subr.bf16.mxu0 0
        %934 = vmatpush2.bf16.msra.mxu0 0
        %935 = vmatprep.mubr.bf16.mxu0 0
        %936 = vmatmul.mubr.bf16.gmra.mxu0 %v902
        %v937 = vpop.f32.mrf.mxu0
        %v938 = vadd.f32 0.0, %v937
        %v939 = vpop.f32.mrf.mxu0
        %v940 = vpop.f32.mrf.mxu0
        %v941 = vpop.f32.mrf.mxu0
        %942 = vdwg.mxu0
        %v943 = vpack.c.bf16 %v938, %v938
        %s944 = scalar_lea.vmem %s2, 8
        %v945 = vld [vmem:[%s944] sm:$0xff]
        %947 = vset.pattern.permute.xlu0 0
        %948 = vperm.xlu0 %947, %v945
        %v949 = vpop.permute.xlu0 %948
        %v951 = vadd.f32 %v537, %v949
        %s952 = scalar_lea.vmem %s3, 4
        %v953 = vld [vmem:[%s952] sm:$0xf]
        %v955 = vsel %vm628, %v953, 0
        %v958 = vsel %vm653, %v943, 0
        %960 = vmatprep.subr.bf16.mxu0 0
        %961 = vmatpush1.bf16.msra.mxu0 0
        %962 = vmatprep.subr.bf16.mxu0 0
        %963 = vmatpush1.bf16.msra.mxu0 0
        %964 = vmatprep.subr.bf16.mxu0 0
        %965 = vmatpush1.bf16.msra.mxu0 0
        %966 = vmatprep.subr.bf16.mxu0 0
        %967 = vmatpush1.bf16.msra.mxu0 0
        %968 = vmatprep.subr.bf16.mxu0 0
        %969 = vmatpush1.bf16.msra.mxu0 0
        %970 = vmatprep.subr.bf16.mxu0 0
        %971 = vmatpush1.bf16.msra.mxu0 0
        %972 = vmatprep.subr.bf16.mxu0 0
        %973 = vmatpush1.bf16.msra.mxu0 0
        %974 = vmatprep.subr.bf16.mxu0 0
        %975 = vmatpush1.bf16.msra.mxu0 %v958
        %976 = vmatprep.subr.bf16.mxu0 0
        %977 = vmatpush2.bf16.msra.mxu0 0
        %978 = vmatprep.subr.bf16.mxu0 0
        %979 = vmatpush2.bf16.msra.mxu0 0
        %980 = vmatprep.subr.bf16.mxu0 0
        %981 = vmatpush2.bf16.msra.mxu0 0
        %982 = vmatprep.subr.bf16.mxu0 0
        %983 = vmatpush2.bf16.msra.mxu0 0
        %984 = vmatprep.subr.bf16.mxu0 0
        %985 = vmatpush2.bf16.msra.mxu0 0
        %986 = vmatprep.subr.bf16.mxu0 0
        %987 = vmatpush2.bf16.msra.mxu0 0
        %988 = vmatprep.subr.bf16.mxu0 0
        %989 = vmatpush2.bf16.msra.mxu0 0
        %990 = vmatprep.subr.bf16.mxu0 0
        %991 = vmatpush2.bf16.msra.mxu0 0
        %992 = vmatprep.mubr.bf16.mxu0 0
        %993 = vmatmul.mubr.bf16.gmra.mxu0 %v955
        %v994 = vpop.f32.mrf.mxu0
        %v995 = vadd.f32 0.0, %v994
        %v996 = vpop.f32.mrf.mxu0
        %v997 = vpop.f32.mrf.mxu0
        %v998 = vpop.f32.mrf.mxu0
        %999 = vdwg.mxu0
        %v1000 = vsub.f32 %v951, %v995
        %s1001 = scalar_lea.vmem %s4, 64
        %v1002 = vld [vmem:[%s1001] sm:$0xf]
        %v1003 = vld [vmem:[%s1001 + $0x4] sm:$0xf]
        %v1004 = vld [vmem:[%s1001 + $0x8] sm:$0xf]
        %v1005 = vld [vmem:[%s1001 + $0xc] sm:$0xf]
        %v1006 = vld [vmem:[%s1001 + $0x10] sm:$0xf]
        %v1007 = vld [vmem:[%s1001 + $0x14] sm:$0xf]
        %v1008 = vld [vmem:[%s1001 + $0x18] sm:$0xf]
        %v1009 = vld [vmem:[%s1001 + $0x1c] sm:$0xf]
        %v1010 = vld [vmem:[%s1001 + $0x20] sm:$0xf]
        %v1011 = vld [vmem:[%s1001 + $0x24] sm:$0xf]
        %v1012 = vld [vmem:[%s1001 + $0x28] sm:$0xf]
        %v1013 = vld [vmem:[%s1001 + $0x2c] sm:$0xf]
        %v1014 = vld [vmem:[%s1001 + $0x30] sm:$0xf]
        %v1015 = vld [vmem:[%s1001 + $0x34] sm:$0xf]
        %v1016 = vld [vmem:[%s1001 + $0x38] sm:$0xf]
        %v1017 = vld [vmem:[%s1001 + $0x3c] sm:$0xf]
        %v1018 = vpack.c.bf16 %v1000, %v1000
        %v1035 = vunpack.c.l.b16 %v1002
        %v1036 = vunpack.c.l.b16 %v1003
        %v1037 = vunpack.c.l.b16 %v1004
        %v1038 = vunpack.c.l.b16 %v1005
        %v1039 = vunpack.c.l.b16 %v1006
        %v1040 = vunpack.c.l.b16 %v1007
        %v1041 = vunpack.c.l.b16 %v1008
        %v1042 = vunpack.c.l.b16 %v1009
        %v1043 = vunpack.c.l.b16 %v1010
        %v1044 = vunpack.c.l.b16 %v1011
        %v1045 = vunpack.c.l.b16 %v1012
        %v1046 = vunpack.c.l.b16 %v1013
        %v1047 = vunpack.c.l.b16 %v1014
        %v1048 = vunpack.c.l.b16 %v1015
        %v1049 = vunpack.c.l.b16 %v1016
        %v1050 = vunpack.c.l.b16 %v1017
        %v1051 = vpack.c.b16 %v1036, %v1035
        %v1052 = vpack.c.b16 %v1038, %v1037
        %v1053 = vpack.c.b16 %v1040, %v1039
        %v1054 = vpack.c.b16 %v1042, %v1041
        %v1055 = vpack.c.b16 %v1044, %v1043
        %v1056 = vpack.c.b16 %v1046, %v1045
        %v1057 = vpack.c.b16 %v1048, %v1047
        %v1058 = vpack.c.b16 %v1050, %v1049
        %v1060 = vsel %vm628, %v1051, 0
        %v1063 = vsel %vm628, %v1052, 0
        %v1066 = vsel %vm628, %v1053, 0
        %v1069 = vsel %vm628, %v1054, 0
        %v1072 = vsel %vm628, %v1055, 0
        %v1075 = vsel %vm628, %v1056, 0
        %v1078 = vsel %vm628, %v1057, 0
        %v1081 = vsel %vm628, %v1058, 0
        %v1084 = vsel %vm653, %v1018, 0
        %1086 = vmatprep.subr.bf16.mxu0 0
        %1087 = vmatpush1.bf16.msra.mxu0 0
        %1088 = vmatprep.subr.bf16.mxu0 0
        %1089 = vmatpush1.bf16.msra.mxu0 0
        %1090 = vmatprep.subr.bf16.mxu0 0
        %1091 = vmatpush1.bf16.msra.mxu0 0
        %1092 = vmatprep.subr.bf16.mxu0 0
        %1093 = vmatpush1.bf16.msra.mxu0 0
        %1094 = vmatprep.subr.bf16.mxu0 0
        %1095 = vmatpush1.bf16.msra.mxu0 0
        %1096 = vmatprep.subr.bf16.mxu0 0
        %1097 = vmatpush1.bf16.msra.mxu0 0
        %1098 = vmatprep.subr.bf16.mxu0 0
        %1099 = vmatpush1.bf16.msra.mxu0 0
        %1100 = vmatprep.subr.bf16.mxu0 0
        %1101 = vmatpush1.bf16.msra.mxu0 %v1084
        %1102 = vmatprep.subr.bf16.mxu0 0
        %1103 = vmatpush2.bf16.msra.mxu0 0
        %1104 = vmatprep.subr.bf16.mxu0 0
        %1105 = vmatpush2.bf16.msra.mxu0 0
        %1106 = vmatprep.subr.bf16.mxu0 0
        %1107 = vmatpush2.bf16.msra.mxu0 0
        %1108 = vmatprep.subr.bf16.mxu0 0
        %1109 = vmatpush2.bf16.msra.mxu0 0
        %1110 = vmatprep.subr.bf16.mxu0 0
        %1111 = vmatpush2.bf16.msra.mxu0 0
        %1112 = vmatprep.subr.bf16.mxu0 0
        %1113 = vmatpush2.bf16.msra.mxu0 0
        %1114 = vmatprep.subr.bf16.mxu0 0
        %1115 = vmatpush2.bf16.msra.mxu0 0
        %1116 = vmatprep.subr.bf16.mxu0 0
        %1117 = vmatpush2.bf16.msra.mxu0 0
        %1118 = vmatprep.mubr.bf16.mxu0 0
        %1119 = vmatmul.mubr.bf16.gmra.mxu0 %v1060
        %v1120 = vpop.f32.mrf.mxu0
        %v1121 = vadd.f32 0.0, %v1120
        %v1122 = vpop.f32.mrf.mxu0
        %v1123 = vpop.f32.mrf.mxu0
        %v1124 = vadd.f32 0.0, %v1123
        %v1125 = vpop.f32.mrf.mxu0
        %1126 = vmatprep.mubr.bf16.mxu0 0
        %1127 = vmatmul.mubr.bf16.gmra.mxu0 %v1063
        %v1128 = vpop.f32.mrf.mxu0
        %v1129 = vadd.f32 0.0, %v1128
        %v1130 = vpop.f32.mrf.mxu0
        %v1131 = vpop.f32.mrf.mxu0
        %v1132 = vadd.f32 0.0, %v1131
        %v1133 = vpop.f32.mrf.mxu0
        %1134 = vmatprep.mubr.bf16.mxu0 0
        %1135 = vmatmul.mubr.bf16.gmra.mxu0 %v1066
        %v1136 = vpop.f32.mrf.mxu0
        %v1137 = vadd.f32 0.0, %v1136
        %v1138 = vpop.f32.mrf.mxu0
        %v1139 = vpop.f32.mrf.mxu0
        %v1140 = vadd.f32 0.0, %v1139
        %v1141 = vpop.f32.mrf.mxu0
        %1142 = vmatprep.mubr.bf16.mxu0 0
        %1143 = vmatmul.mubr.bf16.gmra.mxu0 %v1069
        %v1144 = vpop.f32.mrf.mxu0
        %v1145 = vadd.f32 0.0, %v1144
        %v1146 = vpop.f32.mrf.mxu0
        %v1147 = vpop.f32.mrf.mxu0
        %v1148 = vadd.f32 0.0, %v1147
        %v1149 = vpop.f32.mrf.mxu0
        %1150 = vmatprep.mubr.bf16.mxu0 0
        %1151 = vmatmul.mubr.bf16.gmra.mxu0 %v1072
        %v1152 = vpop.f32.mrf.mxu0
        %v1153 = vadd.f32 0.0, %v1152
        %v1154 = vpop.f32.mrf.mxu0
        %v1155 = vpop.f32.mrf.mxu0
        %v1156 = vadd.f32 0.0, %v1155
        %v1157 = vpop.f32.mrf.mxu0
        %1158 = vmatprep.mubr.bf16.mxu0 0
        %1159 = vmatmul.mubr.bf16.gmra.mxu0 %v1075
        %v1160 = vpop.f32.mrf.mxu0
        %v1161 = vadd.f32 0.0, %v1160
        %v1162 = vpop.f32.mrf.mxu0
        %v1163 = vpop.f32.mrf.mxu0
        %v1164 = vadd.f32 0.0, %v1163
        %v1165 = vpop.f32.mrf.mxu0
        %1166 = vmatprep.mubr.bf16.mxu0 0
        %1167 = vmatmul.mubr.bf16.gmra.mxu0 %v1078
        %v1168 = vpop.f32.mrf.mxu0
        %v1169 = vadd.f32 0.0, %v1168
        %v1170 = vpop.f32.mrf.mxu0
        %v1171 = vpop.f32.mrf.mxu0
        %v1172 = vadd.f32 0.0, %v1171
        %v1173 = vpop.f32.mrf.mxu0
        %1174 = vmatprep.mubr.bf16.mxu0 0
        %1175 = vmatmul.mubr.bf16.gmra.mxu0 %v1081
        %v1176 = vpop.f32.mrf.mxu0
        %v1177 = vadd.f32 0.0, %v1176
        %v1178 = vpop.f32.mrf.mxu0
        %v1179 = vpop.f32.mrf.mxu0
        %v1180 = vadd.f32 0.0, %v1179
        %v1181 = vpop.f32.mrf.mxu0
        %1182 = vdwg.mxu0
        %v1183 = vmax.f32 %v1121, %v1137
        %v1184 = vmax.f32 %v1124, %v1140
        %v1185 = vmax.f32 %v1129, %v1145
        %v1186 = vmax.f32 %v1132, %v1148
        %v1187 = vmax.f32 %v1183, %v1153
        %v1188 = vmax.f32 %v1184, %v1156
        %v1189 = vmax.f32 %v1185, %v1161
        %v1190 = vmax.f32 %v1186, %v1164
        %v1191 = vmax.f32 %v1187, %v1169
        %v1192 = vmax.f32 %v1188, %v1172
        %v1193 = vmax.f32 %v1189, %v1177
        %v1194 = vmax.f32 %v1190, %v1180
        %v1195 = vmax.f32 %v1191, %v1192
        %v1196 = vmax.f32 %v1193, %v1194
        %v1197 = vmax.f32 %v1195, %v1196
        %v1198 = vrot.slane %v1197, 4
        %v1199 = vmax.f32 %v1197, %v1198
        %v1200 = vrot.slane %v1199, 2
        %v1201 = vmax.f32 %v1199, %v1200
        %v1202 = vrot.slane %v1201, 1
        %v1203 = vmax.f32 %v1201, %v1202
        %vm1204 = vcmp.eq.f32.partialorder %v1121, %v1203
        %vm1205 = vcmp.eq.f32.partialorder %v1124, %v1203
        %vm1206 = vcmp.eq.f32.partialorder %v1129, %v1203
        %vm1207 = vcmp.eq.f32.partialorder %v1132, %v1203
        %vm1208 = vcmp.eq.f32.partialorder %v1137, %v1203
        %vm1209 = vcmp.eq.f32.partialorder %v1140, %v1203
        %vm1210 = vcmp.eq.f32.partialorder %v1145, %v1203
        %vm1211 = vcmp.eq.f32.partialorder %v1148, %v1203
        %vm1212 = vcmp.eq.f32.partialorder %v1153, %v1203
        %vm1213 = vcmp.eq.f32.partialorder %v1156, %v1203
        %vm1214 = vcmp.eq.f32.partialorder %v1161, %v1203
        %vm1215 = vcmp.eq.f32.partialorder %v1164, %v1203
        %vm1216 = vcmp.eq.f32.partialorder %v1169, %v1203
        %vm1217 = vcmp.eq.f32.partialorder %v1172, %v1203
        %vm1218 = vcmp.eq.f32.partialorder %v1177, %v1203
        %vm1219 = vcmp.eq.f32.partialorder %v1180, %v1203
        %v1220 = vsel %vm1204, %v548, 128
        %v1221 = vsel %vm1205, %v549, 128
        %v1222 = vsel %vm1206, %v550, 128
        %v1223 = vsel %vm1207, %v551, 128
        %v1224 = vsel %vm1208, %v552, 128
        %v1225 = vsel %vm1209, %v553, 128
        %v1226 = vsel %vm1210, %v554, 128
        %v1227 = vsel %vm1211, %v555, 128
        %v1228 = vsel %vm1212, %v556, 128
        %v1229 = vsel %vm1213, %v557, 128
        %v1230 = vsel %vm1214, %v558, 128
        %v1231 = vsel %vm1215, %v559, 128
        %v1232 = vsel %vm1216, %v560, 128
        %v1233 = vsel %vm1217, %v561, 128
        %v1234 = vsel %vm1218, %v562, 128
        %v1235 = vsel %vm1219, %v563, 128
        %vm1236 = vcmp.lt.s32.totalorder %v1220, %v1224
        %v1237 = vsel %vm1236, %v1220, %v1224
        %vm1238 = vcmp.lt.s32.totalorder %v1221, %v1225
        %v1239 = vsel %vm1238, %v1221, %v1225
        %vm1240 = vcmp.lt.s32.totalorder %v1222, %v1226
        %v1241 = vsel %vm1240, %v1222, %v1226
        %vm1242 = vcmp.lt.s32.totalorder %v1223, %v1227
        %v1243 = vsel %vm1242, %v1223, %v1227
        %vm1244 = vcmp.lt.s32.totalorder %v1237, %v1228
        %v1245 = vsel %vm1244, %v1237, %v1228
        %vm1246 = vcmp.lt.s32.totalorder %v1239, %v1229
        %v1247 = vsel %vm1246, %v1239, %v1229
        %vm1248 = vcmp.lt.s32.totalorder %v1241, %v1230
        %v1249 = vsel %vm1248, %v1241, %v1230
        %vm1250 = vcmp.lt.s32.totalorder %v1243, %v1231
        %v1251 = vsel %vm1250, %v1243, %v1231
        %vm1252 = vcmp.lt.s32.totalorder %v1245, %v1232
        %v1253 = vsel %vm1252, %v1245, %v1232
        %vm1254 = vcmp.lt.s32.totalorder %v1247, %v1233
        %v1255 = vsel %vm1254, %v1247, %v1233
        %vm1256 = vcmp.lt.s32.totalorder %v1249, %v1234
        %v1257 = vsel %vm1256, %v1249, %v1234
        %vm1258 = vcmp.lt.s32.totalorder %v1251, %v1235
        %v1259 = vsel %vm1258, %v1251, %v1235
        %vm1260 = vcmp.lt.s32.totalorder %v1253, %v1255
        %v1261 = vsel %vm1260, %v1253, %v1255
        %vm1262 = vcmp.lt.s32.totalorder %v1257, %v1259
        %v1263 = vsel %vm1262, %v1257, %v1259
        %vm1264 = vcmp.lt.s32.totalorder %v1261, %v1263
        %v1265 = vsel %vm1264, %v1261, %v1263
        %v1266 = vrot.slane %v1265, 4
        %vm1267 = vcmp.lt.s32.totalorder %v1265, %v1266
        %v1268 = vsel %vm1267, %v1265, %v1266
        %v1269 = vrot.slane %v1268, 2
        %vm1270 = vcmp.lt.s32.totalorder %v1268, %v1269
        %v1271 = vsel %vm1270, %v1268, %v1269
        %v1272 = vrot.slane %v1271, 1
        %vm1273 = vcmp.lt.s32.totalorder %v1271, %v1272
        %v1274 = vsel %vm1273, %v1271, %v1272
        %vm1275 = vcmp.eq.s32.totalorder %v548, %v1274
        %vm1276 = vcmp.eq.s32.totalorder %v549, %v1274
        %vm1277 = vcmp.eq.s32.totalorder %v550, %v1274
        %vm1278 = vcmp.eq.s32.totalorder %v551, %v1274
        %vm1279 = vcmp.eq.s32.totalorder %v552, %v1274
        %vm1280 = vcmp.eq.s32.totalorder %v553, %v1274
        %vm1281 = vcmp.eq.s32.totalorder %v554, %v1274
        %vm1282 = vcmp.eq.s32.totalorder %v555, %v1274
        %vm1283 = vcmp.eq.s32.totalorder %v556, %v1274
        %vm1284 = vcmp.eq.s32.totalorder %v557, %v1274
        %vm1285 = vcmp.eq.s32.totalorder %v558, %v1274
        %vm1286 = vcmp.eq.s32.totalorder %v559, %v1274
        %vm1287 = vcmp.eq.s32.totalorder %v560, %v1274
        %vm1288 = vcmp.eq.s32.totalorder %v561, %v1274
        %vm1289 = vcmp.eq.s32.totalorder %v562, %v1274
        %vm1290 = vcmp.eq.s32.totalorder %v563, %v1274
        %v1291 = vsel %vm1275, 1, 0
        %v1292 = vsel %vm1276, 1, 0
        %v1293 = vsel %vm1277, 1, 0
        %v1294 = vsel %vm1278, 1, 0
        %v1295 = vsel %vm1279, 1, 0
        %v1296 = vsel %vm1280, 1, 0
        %v1297 = vsel %vm1281, 1, 0
        %v1298 = vsel %vm1282, 1, 0
        %v1299 = vsel %vm1283, 1, 0
        %v1300 = vsel %vm1284, 1, 0
        %v1301 = vsel %vm1285, 1, 0
        %v1302 = vsel %vm1286, 1, 0
        %v1303 = vsel %vm1287, 1, 0
        %v1304 = vsel %vm1288, 1, 0
        %v1305 = vsel %vm1289, 1, 0
        %v1306 = vsel %vm1290, 1, 0
        %v1307 = vcvt.s32.f32 %v1291
        %v1308 = vcvt.s32.f32 %v1292
        %v1309 = vcvt.s32.f32 %v1293
        %v1310 = vcvt.s32.f32 %v1294
        %v1311 = vcvt.s32.f32 %v1295
        %v1312 = vcvt.s32.f32 %v1296
        %v1313 = vcvt.s32.f32 %v1297
        %v1314 = vcvt.s32.f32 %v1298
        %v1315 = vcvt.s32.f32 %v1299
        %v1316 = vcvt.s32.f32 %v1300
        %v1317 = vcvt.s32.f32 %v1301
        %v1318 = vcvt.s32.f32 %v1302
        %v1319 = vcvt.s32.f32 %v1303
        %v1320 = vcvt.s32.f32 %v1304
        %v1321 = vcvt.s32.f32 %v1305
        %v1322 = vcvt.s32.f32 %v1306
        %v1323 = vpack.c.bf16 %v1308, %v1307
        %v1324 = vpack.c.bf16 %v1310, %v1309
        %v1325 = vpack.c.bf16 %v1312, %v1311
        %v1326 = vpack.c.bf16 %v1314, %v1313
        %v1327 = vpack.c.bf16 %v1316, %v1315
        %v1328 = vpack.c.bf16 %v1318, %v1317
        %v1329 = vpack.c.bf16 %v1320, %v1319
        %v1330 = vpack.c.bf16 %v1322, %v1321
        %s1331 = scalar_lea.vmem %s5, 4
        %v1332 = vld [vmem:[%s1331] sm:$0xf]
        %1333 = vmatprep.subr.bf16.mxu0 0
        %1334 = vmatpush1.bf16.msra.mxu0 %v1330
        %1335 = vmatprep.subr.bf16.mxu0 0
        %1336 = vmatpush1.bf16.msra.mxu0 %v1329
        %1337 = vmatprep.subr.bf16.mxu0 0
        %1338 = vmatpush1.bf16.msra.mxu0 %v1328
        %1339 = vmatprep.subr.bf16.mxu0 0
        %1340 = vmatpush1.bf16.msra.mxu0 %v1327
        %1341 = vmatprep.subr.bf16.mxu0 0
        %1342 = vmatpush1.bf16.msra.mxu0 %v1326
        %1343 = vmatprep.subr.bf16.mxu0 0
        %1344 = vmatpush1.bf16.msra.mxu0 %v1325
        %1345 = vmatprep.subr.bf16.mxu0 0
        %1346 = vmatpush1.bf16.msra.mxu0 %v1324
        %1347 = vmatprep.subr.bf16.mxu0 0
        %1348 = vmatpush1.bf16.msra.mxu0 %v1323
        %1349 = vmatprep.subr.bf16.mxu0 0
        %1350 = vmatpush2.bf16.msra.mxu0 0
        %1351 = vmatprep.subr.bf16.mxu0 0
        %1352 = vmatpush2.bf16.msra.mxu0 0
        %1353 = vmatprep.subr.bf16.mxu0 0
        %1354 = vmatpush2.bf16.msra.mxu0 0
        %1355 = vmatprep.subr.bf16.mxu0 0
        %1356 = vmatpush2.bf16.msra.mxu0 0
        %1357 = vmatprep.subr.bf16.mxu0 0
        %1358 = vmatpush2.bf16.msra.mxu0 0
        %1359 = vmatprep.subr.bf16.mxu0 0
        %1360 = vmatpush2.bf16.msra.mxu0 0
        %1361 = vmatprep.subr.bf16.mxu0 0
        %1362 = vmatpush2.bf16.msra.mxu0 0
        %1363 = vmatprep.subr.bf16.mxu0 0
        %1364 = vmatpush2.bf16.msra.mxu0 0
        %1365 = vmatprep.mubr.bf16.mxu0 0
        %1366 = vmatmul.mubr.bf16.gmra.mxu0 %v1332
        %v1367 = vpop.f32.mrf.mxu0
        %v1368 = vadd.f32 0.0, %v1367
        %v1369 = vpop.f32.mrf.mxu0
        %v1370 = vpop.f32.mrf.mxu0
        %v1371 = vpop.f32.mrf.mxu0
        %1372 = vdwg.mxu0
        %v1373 = vpack.c.bf16 %v1368, %v1368
        %s1374 = scalar_lea.vmem %s2, 16
        %v1375 = vld [vmem:[%s1374] sm:$0xff]
        %1377 = vset.pattern.permute.xlu0 0
        %1378 = vperm.xlu0 %1377, %v1375
        %v1379 = vpop.permute.xlu0 %1378
        %v1381 = vadd.f32 %v542, %v1379
        %v1383 = vrot.slane %v1373, 4
        %v1385 = vsel %vm653, %v943, %v1383
        %s1387 = scalar_lea.vmem %s3, 8
        %v1388 = vld [vmem:[%s1387] sm:$0xf]
        %vm1389 = vcmask 130048
        %v1391 = vsel %vm1389, %v1388, 0
        %1393 = vmatprep.subr.bf16.mxu0 0
        %1394 = vmatpush1.bf16.msra.mxu0 0
        %1395 = vmatprep.subr.bf16.mxu0 0
        %1396 = vmatpush1.bf16.msra.mxu0 0
        %1397 = vmatprep.subr.bf16.mxu0 0
        %1398 = vmatpush1.bf16.msra.mxu0 0
        %1399 = vmatprep.subr.bf16.mxu0 0
        %1400 = vmatpush1.bf16.msra.mxu0 0
        %1401 = vmatprep.subr.bf16.mxu0 0
        %1402 = vmatpush1.bf16.msra.mxu0 0
        %1403 = vmatprep.subr.bf16.mxu0 0
        %1404 = vmatpush1.bf16.msra.mxu0 0
        %1405 = vmatprep.subr.bf16.mxu0 0
        %1406 = vmatpush1.bf16.msra.mxu0 0
        %1407 = vmatprep.subr.bf16.mxu0 0
        %1408 = vmatpush1.bf16.msra.mxu0 %v1385
        %1409 = vmatprep.subr.bf16.mxu0 0
        %1410 = vmatpush2.bf16.msra.mxu0 0
        %1411 = vmatprep.subr.bf16.mxu0 0
        %1412 = vmatpush2.bf16.msra.mxu0 0
        %1413 = vmatprep.subr.bf16.mxu0 0
        %1414 = vmatpush2.bf16.msra.mxu0 0
        %1415 = vmatprep.subr.bf16.mxu0 0
        %1416 = vmatpush2.bf16.msra.mxu0 0
        %1417 = vmatprep.subr.bf16.mxu0 0
        %1418 = vmatpush2.bf16.msra.mxu0 0
        %1419 = vmatprep.subr.bf16.mxu0 0
        %1420 = vmatpush2.bf16.msra.mxu0 0
        %1421 = vmatprep.subr.bf16.mxu0 0
        %1422 = vmatpush2.bf16.msra.mxu0 0
        %1423 = vmatprep.subr.bf16.mxu0 0
        %1424 = vmatpush2.bf16.msra.mxu0 0
        %1425 = vmatprep.mubr.bf16.mxu0 0
        %1426 = vmatmul.mubr.bf16.gmra.mxu0 %v1391
        %v1427 = vpop.f32.mrf.mxu0
        %v1428 = vadd.f32 0.0, %v1427
        %v1429 = vpop.f32.mrf.mxu0
        %v1430 = vpop.f32.mrf.mxu0
        %v1431 = vpop.f32.mrf.mxu0
        %1432 = vdwg.mxu0
        %v1433 = vsub.f32 %v1381, %v1428
        %s1434 = scalar_lea.vmem %s4, 128
        %v1435 = vld [vmem:[%s1434] sm:$0xf]
        %v1436 = vld [vmem:[%s1434 + $0x4] sm:$0xf]
        %v1437 = vld [vmem:[%s1434 + $0x8] sm:$0xf]
        %v1438 = vld [vmem:[%s1434 + $0xc] sm:$0xf]
        %v1439 = vld [vmem:[%s1434 + $0x10] sm:$0xf]
        %v1440 = vld [vmem:[%s1434 + $0x14] sm:$0xf]
        %v1441 = vld [vmem:[%s1434 + $0x18] sm:$0xf]
        %v1442 = vld [vmem:[%s1434 + $0x1c] sm:$0xf]
        %v1443 = vld [vmem:[%s1434 + $0x20] sm:$0xf]
        %v1444 = vld [vmem:[%s1434 + $0x24] sm:$0xf]
        %v1445 = vld [vmem:[%s1434 + $0x28] sm:$0xf]
        %v1446 = vld [vmem:[%s1434 + $0x2c] sm:$0xf]
        %v1447 = vld [vmem:[%s1434 + $0x30] sm:$0xf]
        %v1448 = vld [vmem:[%s1434 + $0x34] sm:$0xf]
        %v1449 = vld [vmem:[%s1434 + $0x38] sm:$0xf]
        %v1450 = vld [vmem:[%s1434 + $0x3c] sm:$0xf]
        %v1451 = vpack.c.bf16 %v1433, %v1433
        %v1468 = vunpack.c.l.b16 %v1435
        %v1469 = vunpack.c.l.b16 %v1436
        %v1470 = vunpack.c.l.b16 %v1437
        %v1471 = vunpack.c.l.b16 %v1438
        %v1472 = vunpack.c.l.b16 %v1439
        %v1473 = vunpack.c.l.b16 %v1440
        %v1474 = vunpack.c.l.b16 %v1441
        %v1475 = vunpack.c.l.b16 %v1442
        %v1476 = vunpack.c.l.b16 %v1443
        %v1477 = vunpack.c.l.b16 %v1444
        %v1478 = vunpack.c.l.b16 %v1445
        %v1479 = vunpack.c.l.b16 %v1446
        %v1480 = vunpack.c.l.b16 %v1447
        %v1481 = vunpack.c.l.b16 %v1448
        %v1482 = vunpack.c.l.b16 %v1449
        %v1483 = vunpack.c.l.b16 %v1450
        %v1484 = vpack.c.b16 %v1469, %v1468
        %v1485 = vpack.c.b16 %v1471, %v1470
        %v1486 = vpack.c.b16 %v1473, %v1472
        %v1487 = vpack.c.b16 %v1475, %v1474
        %v1488 = vpack.c.b16 %v1477, %v1476
        %v1489 = vpack.c.b16 %v1479, %v1478
        %v1490 = vpack.c.b16 %v1481, %v1480
        %v1491 = vpack.c.b16 %v1483, %v1482
        %v1493 = vsel %vm628, %v1484, 0
        %v1496 = vsel %vm628, %v1485, 0
        %v1499 = vsel %vm628, %v1486, 0
        %v1502 = vsel %vm628, %v1487, 0
        %v1505 = vsel %vm628, %v1488, 0
        %v1508 = vsel %vm628, %v1489, 0
        %v1511 = vsel %vm628, %v1490, 0
        %v1514 = vsel %vm628, %v1491, 0
        %v1517 = vsel %vm653, %v1451, 0
        %1519 = vmatprep.subr.bf16.mxu0 0
        %1520 = vmatpush1.bf16.msra.mxu0 0
        %1521 = vmatprep.subr.bf16.mxu0 0
        %1522 = vmatpush1.bf16.msra.mxu0 0
        %1523 = vmatprep.subr.bf16.mxu0 0
        %1524 = vmatpush1.bf16.msra.mxu0 0
        %1525 = vmatprep.subr.bf16.mxu0 0
        %1526 = vmatpush1.bf16.msra.mxu0 0
        %1527 = vmatprep.subr.bf16.mxu0 0
        %1528 = vmatpush1.bf16.msra.mxu0 0
        %1529 = vmatprep.subr.bf16.mxu0 0
        %1530 = vmatpush1.bf16.msra.mxu0 0
        %1531 = vmatprep.subr.bf16.mxu0 0
        %1532 = vmatpush1.bf16.msra.mxu0 0
        %1533 = vmatprep.subr.bf16.mxu0 0
        %1534 = vmatpush1.bf16.msra.mxu0 %v1517
        %1535 = vmatprep.subr.bf16.mxu0 0
        %1536 = vmatpush2.bf16.msra.mxu0 0
        %1537 = vmatprep.subr.bf16.mxu0 0
        %1538 = vmatpush2.bf16.msra.mxu0 0
        %1539 = vmatprep.subr.bf16.mxu0 0
        %1540 = vmatpush2.bf16.msra.mxu0 0
        %1541 = vmatprep.subr.bf16.mxu0 0
        %1542 = vmatpush2.bf16.msra.mxu0 0
        %1543 = vmatprep.subr.bf16.mxu0 0
        %1544 = vmatpush2.bf16.msra.mxu0 0
        %1545 = vmatprep.subr.bf16.mxu0 0
        %1546 = vmatpush2.bf16.msra.mxu0 0
        %1547 = vmatprep.subr.bf16.mxu0 0
        %1548 = vmatpush2.bf16.msra.mxu0 0
        %1549 = vmatprep.subr.bf16.mxu0 0
        %1550 = vmatpush2.bf16.msra.mxu0 0
        %1551 = vmatprep.mubr.bf16.mxu0 0
        %1552 = vmatmul.mubr.bf16.gmra.mxu0 %v1493
        %v1553 = vpop.f32.mrf.mxu0
        %v1554 = vadd.f32 0.0, %v1553
        %v1555 = vpop.f32.mrf.mxu0
        %v1556 = vpop.f32.mrf.mxu0
        %v1557 = vadd.f32 0.0, %v1556
        %v1558 = vpop.f32.mrf.mxu0
        %1559 = vmatprep.mubr.bf16.mxu0 0
        %1560 = vmatmul.mubr.bf16.gmra.mxu0 %v1496
        %v1561 = vpop.f32.mrf.mxu0
        %v1562 = vadd.f32 0.0, %v1561
        %v1563 = vpop.f32.mrf.mxu0
        %v1564 = vpop.f32.mrf.mxu0
        %v1565 = vadd.f32 0.0, %v1564
        %v1566 = vpop.f32.mrf.mxu0
        %1567 = vmatprep.mubr.bf16.mxu0 0
        %1568 = vmatmul.mubr.bf16.gmra.mxu0 %v1499
        %v1569 = vpop.f32.mrf.mxu0
        %v1570 = vadd.f32 0.0, %v1569
        %v1571 = vpop.f32.mrf.mxu0
        %v1572 = vpop.f32.mrf.mxu0
        %v1573 = vadd.f32 0.0, %v1572
        %v1574 = vpop.f32.mrf.mxu0
        %1575 = vmatprep.mubr.bf16.mxu0 0
        %1576 = vmatmul.mubr.bf16.gmra.mxu0 %v1502
        %v1577 = vpop.f32.mrf.mxu0
        %v1578 = vadd.f32 0.0, %v1577
        %v1579 = vpop.f32.mrf.mxu0
        %v1580 = vpop.f32.mrf.mxu0
        %v1581 = vadd.f32 0.0, %v1580
        %v1582 = vpop.f32.mrf.mxu0
        %1583 = vmatprep.mubr.bf16.mxu0 0
        %1584 = vmatmul.mubr.bf16.gmra.mxu0 %v1505
        %v1585 = vpop.f32.mrf.mxu0
        %v1586 = vadd.f32 0.0, %v1585
        %v1587 = vpop.f32.mrf.mxu0
        %v1588 = vpop.f32.mrf.mxu0
        %v1589 = vadd.f32 0.0, %v1588
        %v1590 = vpop.f32.mrf.mxu0
        %1591 = vmatprep.mubr.bf16.mxu0 0
        %1592 = vmatmul.mubr.bf16.gmra.mxu0 %v1508
        %v1593 = vpop.f32.mrf.mxu0
        %v1594 = vadd.f32 0.0, %v1593
        %v1595 = vpop.f32.mrf.mxu0
        %v1596 = vpop.f32.mrf.mxu0
        %v1597 = vadd.f32 0.0, %v1596
        %v1598 = vpop.f32.mrf.mxu0
        %1599 = vmatprep.mubr.bf16.mxu0 0
        %1600 = vmatmul.mubr.bf16.gmra.mxu0 %v1511
        %v1601 = vpop.f32.mrf.mxu0
        %v1602 = vadd.f32 0.0, %v1601
        %v1603 = vpop.f32.mrf.mxu0
        %v1604 = vpop.f32.mrf.mxu0
        %v1605 = vadd.f32 0.0, %v1604
        %v1606 = vpop.f32.mrf.mxu0
        %1607 = vmatprep.mubr.bf16.mxu0 0
        %1608 = vmatmul.mubr.bf16.gmra.mxu0 %v1514
        %v1609 = vpop.f32.mrf.mxu0
        %v1610 = vadd.f32 0.0, %v1609
        %v1611 = vpop.f32.mrf.mxu0
        %v1612 = vpop.f32.mrf.mxu0
        %v1613 = vadd.f32 0.0, %v1612
        %v1614 = vpop.f32.mrf.mxu0
        %1615 = vdwg.mxu0
        %v1616 = vmax.f32 %v1554, %v1570
        %v1617 = vmax.f32 %v1557, %v1573
        %v1618 = vmax.f32 %v1562, %v1578
        %v1619 = vmax.f32 %v1565, %v1581
        %v1620 = vmax.f32 %v1616, %v1586
        %v1621 = vmax.f32 %v1617, %v1589
        %v1622 = vmax.f32 %v1618, %v1594
        %v1623 = vmax.f32 %v1619, %v1597
        %v1624 = vmax.f32 %v1620, %v1602
        %v1625 = vmax.f32 %v1621, %v1605
        %v1626 = vmax.f32 %v1622, %v1610
        %v1627 = vmax.f32 %v1623, %v1613
        %v1628 = vmax.f32 %v1624, %v1625
        %v1629 = vmax.f32 %v1626, %v1627
        %v1630 = vmax.f32 %v1628, %v1629
        %v1631 = vrot.slane %v1630, 4
        %v1632 = vmax.f32 %v1630, %v1631
        %v1633 = vrot.slane %v1632, 2
        %v1634 = vmax.f32 %v1632, %v1633
        %v1635 = vrot.slane %v1634, 1
        %v1636 = vmax.f32 %v1634, %v1635
        %vm1637 = vcmp.eq.f32.partialorder %v1554, %v1636
        %vm1638 = vcmp.eq.f32.partialorder %v1557, %v1636
        %vm1639 = vcmp.eq.f32.partialorder %v1562, %v1636
        %vm1640 = vcmp.eq.f32.partialorder %v1565, %v1636
        %vm1641 = vcmp.eq.f32.partialorder %v1570, %v1636
        %vm1642 = vcmp.eq.f32.partialorder %v1573, %v1636
        %vm1643 = vcmp.eq.f32.partialorder %v1578, %v1636
        %vm1644 = vcmp.eq.f32.partialorder %v1581, %v1636
        %vm1645 = vcmp.eq.f32.partialorder %v1586, %v1636
        %vm1646 = vcmp.eq.f32.partialorder %v1589, %v1636
        %vm1647 = vcmp.eq.f32.partialorder %v1594, %v1636
        %vm1648 = vcmp.eq.f32.partialorder %v1597, %v1636
        %vm1649 = vcmp.eq.f32.partialorder %v1602, %v1636
        %vm1650 = vcmp.eq.f32.partialorder %v1605, %v1636
        %vm1651 = vcmp.eq.f32.partialorder %v1610, %v1636
        %vm1652 = vcmp.eq.f32.partialorder %v1613, %v1636
        %v1653 = vsel %vm1637, %v548, 128
        %v1654 = vsel %vm1638, %v549, 128
        %v1655 = vsel %vm1639, %v550, 128
        %v1656 = vsel %vm1640, %v551, 128
        %v1657 = vsel %vm1641, %v552, 128
        %v1658 = vsel %vm1642, %v553, 128
        %v1659 = vsel %vm1643, %v554, 128
        %v1660 = vsel %vm1644, %v555, 128
        %v1661 = vsel %vm1645, %v556, 128
        %v1662 = vsel %vm1646, %v557, 128
        %v1663 = vsel %vm1647, %v558, 128
        %v1664 = vsel %vm1648, %v559, 128
        %v1665 = vsel %vm1649, %v560, 128
        %v1666 = vsel %vm1650, %v561, 128
        %v1667 = vsel %vm1651, %v562, 128
        %v1668 = vsel %vm1652, %v563, 128
        %vm1669 = vcmp.lt.s32.totalorder %v1653, %v1657
        %v1670 = vsel %vm1669, %v1653, %v1657
        %vm1671 = vcmp.lt.s32.totalorder %v1654, %v1658
        %v1672 = vsel %vm1671, %v1654, %v1658
        %vm1673 = vcmp.lt.s32.totalorder %v1655, %v1659
        %v1674 = vsel %vm1673, %v1655, %v1659
        %vm1675 = vcmp.lt.s32.totalorder %v1656, %v1660
        %v1676 = vsel %vm1675, %v1656, %v1660
        %vm1677 = vcmp.lt.s32.totalorder %v1670, %v1661
        %v1678 = vsel %vm1677, %v1670, %v1661
        %vm1679 = vcmp.lt.s32.totalorder %v1672, %v1662
        %v1680 = vsel %vm1679, %v1672, %v1662
        %vm1681 = vcmp.lt.s32.totalorder %v1674, %v1663
        %v1682 = vsel %vm1681, %v1674, %v1663
        %vm1683 = vcmp.lt.s32.totalorder %v1676, %v1664
        %v1684 = vsel %vm1683, %v1676, %v1664
        %vm1685 = vcmp.lt.s32.totalorder %v1678, %v1665
        %v1686 = vsel %vm1685, %v1678, %v1665
        %vm1687 = vcmp.lt.s32.totalorder %v1680, %v1666
        %v1688 = vsel %vm1687, %v1680, %v1666
        %vm1689 = vcmp.lt.s32.totalorder %v1682, %v1667
        %v1690 = vsel %vm1689, %v1682, %v1667
        %vm1691 = vcmp.lt.s32.totalorder %v1684, %v1668
        %v1692 = vsel %vm1691, %v1684, %v1668
        %vm1693 = vcmp.lt.s32.totalorder %v1686, %v1688
        %v1694 = vsel %vm1693, %v1686, %v1688
        %vm1695 = vcmp.lt.s32.totalorder %v1690, %v1692
        %v1696 = vsel %vm1695, %v1690, %v1692
        %vm1697 = vcmp.lt.s32.totalorder %v1694, %v1696
        %v1698 = vsel %vm1697, %v1694, %v1696
        %v1699 = vrot.slane %v1698, 4
        %vm1700 = vcmp.lt.s32.totalorder %v1698, %v1699
        %v1701 = vsel %vm1700, %v1698, %v1699
        %v1702 = vrot.slane %v1701, 2
        %vm1703 = vcmp.lt.s32.totalorder %v1701, %v1702
        %v1704 = vsel %vm1703, %v1701, %v1702
        %v1705 = vrot.slane %v1704, 1
        %vm1706 = vcmp.lt.s32.totalorder %v1704, %v1705
        %v1707 = vsel %vm1706, %v1704, %v1705
        %vm1708 = vcmp.eq.s32.totalorder %v548, %v1707
        %vm1709 = vcmp.eq.s32.totalorder %v549, %v1707
        %vm1710 = vcmp.eq.s32.totalorder %v550, %v1707
        %vm1711 = vcmp.eq.s32.totalorder %v551, %v1707
        %vm1712 = vcmp.eq.s32.totalorder %v552, %v1707
        %vm1713 = vcmp.eq.s32.totalorder %v553, %v1707
        %vm1714 = vcmp.eq.s32.totalorder %v554, %v1707
        %vm1715 = vcmp.eq.s32.totalorder %v555, %v1707
        %vm1716 = vcmp.eq.s32.totalorder %v556, %v1707
        %vm1717 = vcmp.eq.s32.totalorder %v557, %v1707
        %vm1718 = vcmp.eq.s32.totalorder %v558, %v1707
        %vm1719 = vcmp.eq.s32.totalorder %v559, %v1707
        %vm1720 = vcmp.eq.s32.totalorder %v560, %v1707
        %vm1721 = vcmp.eq.s32.totalorder %v561, %v1707
        %vm1722 = vcmp.eq.s32.totalorder %v562, %v1707
        %vm1723 = vcmp.eq.s32.totalorder %v563, %v1707
        %v1724 = vsel %vm1708, 1, 0
        %v1725 = vsel %vm1709, 1, 0
        %v1726 = vsel %vm1710, 1, 0
        %v1727 = vsel %vm1711, 1, 0
        %v1728 = vsel %vm1712, 1, 0
        %v1729 = vsel %vm1713, 1, 0
        %v1730 = vsel %vm1714, 1, 0
        %v1731 = vsel %vm1715, 1, 0
        %v1732 = vsel %vm1716, 1, 0
        %v1733 = vsel %vm1717, 1, 0
        %v1734 = vsel %vm1718, 1, 0
        %v1735 = vsel %vm1719, 1, 0
        %v1736 = vsel %vm1720, 1, 0
        %v1737 = vsel %vm1721, 1, 0
        %v1738 = vsel %vm1722, 1, 0
        %v1739 = vsel %vm1723, 1, 0
        %v1740 = vcvt.s32.f32 %v1724
        %v1741 = vcvt.s32.f32 %v1725
        %v1742 = vcvt.s32.f32 %v1726
        %v1743 = vcvt.s32.f32 %v1727
        %v1744 = vcvt.s32.f32 %v1728
        %v1745 = vcvt.s32.f32 %v1729
        %v1746 = vcvt.s32.f32 %v1730
        %v1747 = vcvt.s32.f32 %v1731
        %v1748 = vcvt.s32.f32 %v1732
        %v1749 = vcvt.s32.f32 %v1733
        %v1750 = vcvt.s32.f32 %v1734
        %v1751 = vcvt.s32.f32 %v1735
        %v1752 = vcvt.s32.f32 %v1736
        %v1753 = vcvt.s32.f32 %v1737
        %v1754 = vcvt.s32.f32 %v1738
        %v1755 = vcvt.s32.f32 %v1739
        %v1756 = vpack.c.bf16 %v1741, %v1740
        %v1757 = vpack.c.bf16 %v1743, %v1742
        %v1758 = vpack.c.bf16 %v1745, %v1744
        %v1759 = vpack.c.bf16 %v1747, %v1746
        %v1760 = vpack.c.bf16 %v1749, %v1748
        %v1761 = vpack.c.bf16 %v1751, %v1750
        %v1762 = vpack.c.bf16 %v1753, %v1752
        %v1763 = vpack.c.bf16 %v1755, %v1754
        %s1764 = scalar_lea.vmem %s5, 8
        %v1765 = vld [vmem:[%s1764] sm:$0xf]
        %1766 = vmatprep.subr.bf16.mxu0 0
        %1767 = vmatpush1.bf16.msra.mxu0 %v1763
        %1768 = vmatprep.subr.bf16.mxu0 0
        %1769 = vmatpush1.bf16.msra.mxu0 %v1762
        %1770 = vmatprep.subr.bf16.mxu0 0
        %1771 = vmatpush1.bf16.msra.mxu0 %v1761
        %1772 = vmatprep.subr.bf16.mxu0 0
        %1773 = vmatpush1.bf16.msra.mxu0 %v1760
        %1774 = vmatprep.subr.bf16.mxu0 0
        %1775 = vmatpush1.bf16.msra.mxu0 %v1759
        %1776 = vmatprep.subr.bf16.mxu0 0
        %1777 = vmatpush1.bf16.msra.mxu0 %v1758
        %1778 = vmatprep.subr.bf16.mxu0 0
        %1779 = vmatpush1.bf16.msra.mxu0 %v1757
        %1780 = vmatprep.subr.bf16.mxu0 0
        %1781 = vmatpush1.bf16.msra.mxu0 %v1756
        %1782 = vmatprep.subr.bf16.mxu0 0
        %1783 = vmatpush2.bf16.msra.mxu0 0
        %1784 = vmatprep.subr.bf16.mxu0 0
        %1785 = vmatpush2.bf16.msra.mxu0 0
        %1786 = vmatprep.subr.bf16.mxu0 0
        %1787 = vmatpush2.bf16.msra.mxu0 0
        %1788 = vmatprep.subr.bf16.mxu0 0
        %1789 = vmatpush2.bf16.msra.mxu0 0
        %1790 = vmatprep.subr.bf16.mxu0 0
        %1791 = vmatpush2.bf16.msra.mxu0 0
        %1792 = vmatprep.subr.bf16.mxu0 0
        %1793 = vmatpush2.bf16.msra.mxu0 0
        %1794 = vmatprep.subr.bf16.mxu0 0
        %1795 = vmatpush2.bf16.msra.mxu0 0
        %1796 = vmatprep.subr.bf16.mxu0 0
        %1797 = vmatpush2.bf16.msra.mxu0 0
        %1798 = vmatprep.mubr.bf16.mxu0 0
        %1799 = vmatmul.mubr.bf16.gmra.mxu0 %v1765
        %v1800 = vpop.f32.mrf.mxu0
        %v1801 = vadd.f32 0.0, %v1800
        %v1802 = vpop.f32.mrf.mxu0
        %v1803 = vpop.f32.mrf.mxu0
        %v1804 = vpop.f32.mrf.mxu0
        %1805 = vdwg.mxu0
        %v1806 = vpack.c.bf16 %v1801, %v1801
        %v1807 = vld [vmem:[%s6] sm:$0xf]
        %v1808 = vld [vmem:[%s6 + $0x4] sm:$0xf]
        %v1809 = vld [vmem:[%s6 + $0x8] sm:$0xf]
        %v1810 = vld [vmem:[%s6 + $0xc] sm:$0xf]
        %v1811 = vld [vmem:[%s7] sm:$0xff]
        %v1812 = vld [vmem:[%s7 + $0x8] sm:$0xff]
        %v1813 = vld [vmem:[%s7 + $0x10] sm:$0xff]
        %v1814 = vld [vmem:[%s7 + $0x18] sm:$0xff]
        %1816 = vset.pattern.permute.xlu0 0
        %1817 = vperm.xlu0 %1816, %v1811
        %v1818 = vpop.permute.xlu0 %1817
        %1821 = vset.pattern.permute.xlu0 0
        %1822 = vperm.xlu0 %1821, %v1812
        %v1823 = vpop.permute.xlu0 %1822
        %1826 = vset.pattern.permute.xlu0 0
        %1827 = vperm.xlu0 %1826, %v1813
        %v1828 = vpop.permute.xlu0 %1827
        %1831 = vset.pattern.permute.xlu0 0
        %1832 = vperm.xlu0 %1831, %v1814
        %v1833 = vpop.permute.xlu0 %1832
        %v1839 = vunpack.c.l.b16 %v1807
        %v1840 = vunpack.c.l.b16 %v1808
        %v1841 = vunpack.c.l.b16 %v1809
        %v1842 = vunpack.c.l.b16 %v1810
        %v1843 = vpack.c.b16 %v1840, %v1839
        %v1844 = vpack.c.b16 %v1842, %v1841
        %vm1845 = vcmask 195584
        %v1847 = vsel %vm1845, %v1843, 0
        %v1850 = vsel %vm1845, %v1844, 0
        %v1853 = vsel %vm653, %v1806, 0
        %1855 = vmatprep.subr.bf16.mxu0 0
        %1856 = vmatpush1.bf16.msra.mxu0 0
        %1857 = vmatprep.subr.bf16.mxu0 0
        %1858 = vmatpush1.bf16.msra.mxu0 0
        %1859 = vmatprep.subr.bf16.mxu0 0
        %1860 = vmatpush1.bf16.msra.mxu0 0
        %1861 = vmatprep.subr.bf16.mxu0 0
        %1862 = vmatpush1.bf16.msra.mxu0 0
        %1863 = vmatprep.subr.bf16.mxu0 0
        %1864 = vmatpush1.bf16.msra.mxu0 0
        %1865 = vmatprep.subr.bf16.mxu0 0
        %1866 = vmatpush1.bf16.msra.mxu0 0
        %1867 = vmatprep.subr.bf16.mxu0 0
        %1868 = vmatpush1.bf16.msra.mxu0 %v1853
        %1869 = vmatprep.subr.bf16.mxu0 0
        %1870 = vmatpush1.bf16.msra.mxu0 %v1385
        %1871 = vmatprep.subr.bf16.mxu0 0
        %1872 = vmatpush2.bf16.msra.mxu0 0
        %1873 = vmatprep.subr.bf16.mxu0 0
        %1874 = vmatpush2.bf16.msra.mxu0 0
        %1875 = vmatprep.subr.bf16.mxu0 0
        %1876 = vmatpush2.bf16.msra.mxu0 0
        %1877 = vmatprep.subr.bf16.mxu0 0
        %1878 = vmatpush2.bf16.msra.mxu0 0
        %1879 = vmatprep.subr.bf16.mxu0 0
        %1880 = vmatpush2.bf16.msra.mxu0 0
        %1881 = vmatprep.subr.bf16.mxu0 0
        %1882 = vmatpush2.bf16.msra.mxu0 0
        %1883 = vmatprep.subr.bf16.mxu0 0
        %1884 = vmatpush2.bf16.msra.mxu0 0
        %1885 = vmatprep.subr.bf16.mxu0 0
        %1886 = vmatpush2.bf16.msra.mxu0 0
        %1887 = vmatprep.mubr.bf16.mxu0 0
        %1888 = vmatmul.mubr.bf16.gmra.mxu0 %v1847
        %v1889 = vpop.f32.mrf.mxu0
        %v1890 = vadd.f32 %v1818, %v1889
        %v1891 = vpop.f32.mrf.mxu0
        %v1892 = vpop.f32.mrf.mxu0
        %v1893 = vadd.f32 %v1823, %v1892
        %v1894 = vpop.f32.mrf.mxu0
        %1895 = vmatprep.mubr.bf16.mxu0 0
        %1896 = vmatmul.mubr.bf16.gmra.mxu0 %v1850
        %v1897 = vpop.f32.mrf.mxu0
        %v1898 = vadd.f32 %v1828, %v1897
        %v1899 = vpop.f32.mrf.mxu0
        %v1900 = vpop.f32.mrf.mxu0
        %v1901 = vadd.f32 %v1833, %v1900
        %v1902 = vpop.f32.mrf.mxu0
        %1903 = vdwg.mxu0
        %1904 = vst [vmem:[%s438] sm:$0xff] %v1890
        %1905 = vst [vmem:[%s438 + $0x8] sm:$0xff] %v1893
        %1906 = vst [vmem:[%s438 + $0x10] sm:$0xff] %v1898
        %1907 = vst [vmem:[%s438 + $0x18] sm:$0xff] %v1901
        %vm1908 = vcmask 1040384
        %v1909 = vsel %vm1908, %v845, %v1274
        %vm1910 = vcmask 1041408
        %v1911 = vsel %vm1910, %v1909, %v1707
        %1912 = vst [vmem:[%s463] sm:$0x7] %v1911
        %1913 = vst [vmem:[%s455] sm:$0xff] %v570
        %1914 = vst [vmem:[%s455 + $0x8] sm:$0xff] %v1000
        %1915 = vst [vmem:[%s455 + $0x10] sm:$0xff] %v1433
        %s1916 = sand.u32 %s225, 1
        %s1917 = scalar_lea.sflag [#allocation4], %s1916
        %s1918 = sand.u32 %s225, 1
        %s1919 = smul.addr %s1918, 32
        %s1920 = scalar_lea.vmem [#allocation3], %s1919
        %p1921 = scmp.lt.s32.totalorder %s32, 1
        %s1922 = scalar_select %p1921, %s32, 1
        %p1923 = scmp.lt.s32.totalorder %s33, 2
        %s1924 = scalar_select %p1923, %s33, 2
        %s1925 = smul.addr %s1922, 3
        %s1926 = sadd.s32 %s1924, %s1925
        %s1927 = smul.addr %s1926, 4
        %s1928 = scalar_lea.vmem %s9, %s1927
        %s1929 = sand.u32 %s281, 1
        %s1930 = scalar_lea.sflag [#allocation6], %s1929
        %s1931 = sand.u32 %s281, 1
        %s1932 = smul.addr %s1931, 24
        %s1933 = scalar_lea.vmem [#allocation5], %s1932
        // Predicated region
        $region94: #{tpu_custom_call.1} parent=88 // pred_check
          %p1934 = pneg %p235
        $region95: #{tpu_custom_call.1} parent=88 // pred_check_branch
          %1936 = sbr.rel (%p1934) target = $region97
        $region96: #{tpu_custom_call.1} parent=88 // pred_region
          %s1938 = ssub.s32 512, 512
          %1939 = vsyncadd %s1917, %s1938
          %s1940 = smul.addr %s32, 12
          %s1941 = sadd.s32 %s33, %s1940
          %s1942 = smul.addr %s1941, 128
          %s1943 = scalar_lea.hbm %s8, %s1942
          %s1944 = sshll.u32 %s1920, 4
          %s1945 = int_to_ptr.vmem [resolvable:$true] %s1944
          %1950 = dma.vmem_to_hbm [thread:$0]  %s1945, 512, %s1943, %s1917, 128, 384, 8
        $region97: #{tpu_custom_call.1} parent=88 // pred_fallthru
          _
        // Predicated region
        $region98: #{tpu_custom_call.1} parent=88 // pred_check
          %p1951 = pneg %p263
        $region99: #{tpu_custom_call.1} parent=88 // pred_check_branch
          %1953 = sbr.rel (%p1951) target = $region101
        $region100: #{tpu_custom_call.1} parent=88 // pred_region
          _
        $region101: #{tpu_custom_call.1} parent=88 // pred_fallthru
          _
        // Predicated region
        $region102: #{tpu_custom_call.1} parent=88 // pred_check
          %p1954 = pneg %p291
        $region103: #{tpu_custom_call.1} parent=88 // pred_check_branch
          %1956 = sbr.rel (%p1954) target = $region105
        $region104: #{tpu_custom_call.1} parent=88 // pred_region
          %s1958 = ssub.s32 384, 384
          %1959 = vsyncadd %s1930, %s1958
          %s1960 = smul.addr %s32, 9
          %s1961 = sadd.s32 %s33, %s1960
          %s1962 = smul.addr %s1961, 128
          %s1963 = scalar_lea.hbm %s10, %s1962
          %s1964 = sshll.u32 %s1933, 4
          %s1965 = int_to_ptr.vmem [resolvable:$true] %s1964
          %1970 = dma.vmem_to_hbm [thread:$0]  %s1965, 384, %s1963, %s1930, 128, 384, 8
        $region105: #{tpu_custom_call.1} parent=88 // pred_fallthru
          _
      $region89: #{tpu_custom_call.1} parent=5 // pred_fallthru
        _
      %p1971 = scmp.le.s32.totalorder 2, %s23
      // Predicated region
      $region106: #{tpu_custom_call.1} parent=5 // pred_check
        %p1972 = pneg %p1971
      $region107: #{tpu_custom_call.1} parent=5 // pred_check_branch
        %1974 = sbr.rel (%p1972) target = $region109
      $region108: #{tpu_custom_call.1} parent=5 // pred_region
        %s1975 = ssub.s32 %s23, 2
        // Predicated region
        $region110: #{tpu_custom_call.1} parent=108 // pred_check
          %p1976 = pneg %p241
        $region111: #{tpu_custom_call.1} parent=108 // pred_check_branch
          %1978 = sbr.rel (%p1976) target = $region113
        $region112: #{tpu_custom_call.1} parent=108 // pred_region
          %s1979 = sand.u32 %s226, 1
          %s1980 = scalar_lea.sflag [#allocation4], %s1979
          %s1981 = sand.u32 %s226, 1
          %s1982 = smul.addr %s1981, 32
          %s1983 = scalar_lea.vmem [#allocation3], %s1982
          %1984 = dma.done %s1980, 512
        $region113: #{tpu_custom_call.1} parent=108 // pred_fallthru
          _
        // Predicated region
        $region114: #{tpu_custom_call.1} parent=108 // pred_check
          %p1985 = pneg %p269
        $region115: #{tpu_custom_call.1} parent=108 // pred_check_branch
          %1987 = sbr.rel (%p1985) target = $region117
        $region116: #{tpu_custom_call.1} parent=108 // pred_region
          %p1988 = scmp.lt.s32.totalorder %s34, 1
          %s1989 = scalar_select %p1988, %s34, 1
          %p1990 = scmp.lt.s32.totalorder %s35, 2
          %s1991 = scalar_select %p1990, %s35, 2
          %s1992 = smul.addr %s1989, 3
          %s1993 = sadd.s32 %s1991, %s1992
          %s1994 = smul.addr %s1993, 4
          %s1995 = scalar_lea.vmem %s9, %s1994
        $region117: #{tpu_custom_call.1} parent=108 // pred_fallthru
          _
        // Predicated region
        $region118: #{tpu_custom_call.1} parent=108 // pred_check
          %p1996 = pneg %p297
        $region119: #{tpu_custom_call.1} parent=108 // pred_check_branch
          %1998 = sbr.rel (%p1996) target = $region121
        $region120: #{tpu_custom_call.1} parent=108 // pred_region
          %s1999 = sand.u32 %s282, 1
          %s2000 = scalar_lea.sflag [#allocation6], %s1999
          %s2001 = sand.u32 %s282, 1
          %s2002 = smul.addr %s2001, 24
          %s2003 = scalar_lea.vmem [#allocation5], %s2002
          %2004 = dma.done %s2000, 384
        $region121: #{tpu_custom_call.1} parent=108 // pred_fallthru
          _
      $region109: #{tpu_custom_call.1} parent=5 // pred_fallthru
        _
    $region6: #{tpu_custom_call.1} parent=1 // loop_footer
      %s27 = sadd.s32 1, %s23
    $region7: #{tpu_custom_call.1} parent=1 // loop_footer_branch
      %22 = sbr.rel target = $region3
    $region8: #{tpu_custom_call.1} parent=1 // loop_exit
      _
    %2005 = vsyncpa [#allocation4], 1
    %s2006 = scalar_lea.sflag [#allocation4], 1
    %2007 = vsyncpa %s2006, 1
    %2008 = vsyncpa [#allocation6], 1
    %s2009 = scalar_lea.sflag [#allocation6], 1
    %2010 = vsyncpa %s2009, 1

</llo_original>
